<compile_context>
chip_gen: v7x
topology: tpu7x:2x2x1
jax: 0.10.0
libtpu: 0.0.40
codegen_flags: <defaults>
</compile_context>

<pallas_src>
import jax
import jax.numpy as jnp
from jax import lax
from jax.experimental import pallas as pl
from jax.experimental.pallas import tpu as pltpu

EPS = 1e-5
NEG_SLOPE = 0.2
LANES = 128  # every channel / K dim is zero-padded to this many lanes


# ---------------------------------------------------------------------------
# The fused kernel
# ---------------------------------------------------------------------------
def _fused_discriminator_kernel(x1_ref, w1_ref, g1_ref, b1_ref,
                                w2_ref, g2_ref, b2_ref, w3_ref,
                                o_ref, z2_ref):
    """Whole Discriminator forward.

    x1_ref : (64N, 128) dense layer-1 im2col.  Rows ordered
             (group g=2p+q, n, u_idx, v_idx); lanes (dy*4+dx)*3+c (48 used).
    w1_ref : (128, 128)  rows (dy*4+dx)*3+c, cols cout (16 used).
    w2_ref : (512, 128)  4 row blocks (du,dv); within a block rows
             16*(2p+q)+c (64 used), cols cout (32 used).
    w3_ref : (16, 128)   final conv weight, row = A*4+B, col = channel.
    g*/b*  : (1, 128)    BN affine params (zero padded).
    o_ref  : (N, 1)
    z2_ref : (N, 8, 8, 128) VMEM scratch holding the space-to-depth layout of
             the zero-padded layer-1 output:
               z2[n, u, v, 16*(2p+q)+c] = y1_pad[n, 2u+p, 2v+q, c]
             (u, v in 0..4 used; lanes 64..127 and the halo sub-slots are 0).
    """
    n = o_ref.shape[0]

    # --------------------- layer 1: conv 3->16 (one GEMM) --------------------
    acc1 = jnp.dot(x1_ref[...], w1_ref[...],
                   preferred_element_type=jnp.float32)            # (64N, 128)

    # BatchNorm2d (training-mode batch stats), two-pass variance.
    inv1 = 1.0 / (64 * n)
    mean1 = jnp.sum(acc1, axis=0, keepdims=True) * inv1
    d1 = acc1 - mean1
    var1 = jnp.sum(d1 * d1, axis=0, keepdims=True) * inv1
    scale1 = g1_ref[...] * lax.rsqrt(var1 + EPS)
    y1 = d1 * scale1 + b1_ref[...]
    y1 = jnp.where(y1 >= 0, y1, NEG_SLOPE * y1)      # lanes >= 16 stay exactly 0

    # Zero only the rows layer 2 reads (u = 0..4); this is the accumulation
    # base of the parity scatter and supplies the conv padding halo.
    z2_ref[:, 0:5, :, :] = jnp.zeros((n, 5, 8, LANES), jnp.float32)

    # Scatter y1 into the space-to-depth scratch.  Parity group (p, q) holds
    # output pixels (i, j) = (2u+p-1, 2v+q-1); its 16 channels are moved to
    # lane slot 16*(2p+q) with a lane roll (XLU, free slot) and accumulated
    # into the region it owns (groups are lane-disjoint, halo stays zero).
    for g, (p, q) in enumerate(((0, 0), (0, 1), (1, 0), (1, 1))):
        blk = y1[g * 16 * n:(g + 1) * 16 * n, :]                  # (16N, 128)
        if g:
            blk = pltpu.roll(blk, 16 * g, axis=1)
        z2_ref[:, 1 - p:5 - p, 1 - q:5 - q, :] += blk.reshape(n, 4, 4, LANES)

    # --------------------- layer 2: conv 16->32 -------------------------------
    # Four accumulated (16N, 128) @ (128, 128) GEMMs, one per 2x2 quadrant
    # (du, dv) of the 4x4 kernel; each K block is the dense 64-lane (p,q,c)
    # group, sliced contiguously from the scratch (no concat materialization).
    acc2 = None
    for blk_i, (du, dv) in enumerate(((0, 0), (0, 1), (1, 0), (1, 1))):
        lhs = z2_ref[:, du:du + 4, dv:dv + 4, :].reshape(16 * n, LANES)
        term = jnp.dot(lhs, w2_ref[blk_i * LANES:(blk_i + 1) * LANES, :],
                       preferred_element_type=jnp.float32)
        acc2 = term if acc2 is None else acc2 + term              # (16N, 128)

    inv2 = 1.0 / (16 * n)
    mean2 = jnp.sum(acc2, axis=0, keepdims=True) * inv2
    d2 = acc2 - mean2
    var2 = jnp.sum(d2 * d2, axis=0, keepdims=True) * inv2
    scale2 = g2_ref[...] * lax.rsqrt(var2 + EPS)
    y2 = d2 * scale2 + b2_ref[...]
    y2 = jnp.where(y2 >= 0, y2, NEG_SLOPE * y2)                   # (16N, 128)

    # -------------------- final conv (Cout=1) + sigmoid ----------------------
    # VPU multiply + XLU reductions instead of a 1-column matmul.
    prod = y2.reshape(n, 16, LANES) * w3_ref[...]                 # (N, 16, 128)
    t = jnp.sum(prod, axis=2)                                     # (N, 16)
    logit = jnp.sum(t, axis=1, keepdims=True)                     # (N, 1)
    o_ref[...] = jax.nn.sigmoid(logit)


# ---------------------------------------------------------------------------
# Glue: per-call input prep (dense im2col) and one-time weight packing
# ---------------------------------------------------------------------------
def _prep_input(x_nchw):
    """NCHW -> dense layer-1 im2col (64N, 128), rows (group, n, u, v)."""
    n, c, h, w = x_nchw.shape
    assert (h, w, c) == (16, 16, 3)
    x = jnp.transpose(x_nchw, (0, 2, 3, 1)).astype(jnp.float32)        # (N,16,16,3)
    xp = jnp.pad(x, ((0, 0), (1, 1), (1, 1), (0, 0)))                  # (N,18,18,3)
    # patches[n, i, j, (dy*4+dx)*3 + c] = xp[n, 2i+dy, 2j+dx, c]
    pieces = [xp[:, dy:dy + 16:2, dx:dx + 16:2, :]
              for dy in range(4) for dx in range(4)]
    pat = jnp.stack(pieces, axis=3).reshape(n, 8, 8, 48)
    # parity groups (p, q): output pixels i = 2u+p-1, j = 2v+q-1
    groups = []
    for p in (0, 1):
        for q in (0, 1):
            blk = pat[:, (1 - p)::2, (1 - q)::2, :]                    # (N,4,4,48)
            groups.append(blk.reshape(n * 16, 48))
    x1 = jnp.concatenate(groups, axis=0)                               # (64N, 48)
    return jnp.pad(x1, ((0, 0), (0, LANES - 48)))                      # (64N, 128)


def pack_params(blocks, w_final):
    """Pack/pad all weights ONCE (outside the per-call jitted path)."""
    assert len(blocks) == 2
    assert blocks[0]["w"].shape == (16, 3, 4, 4)
    assert blocks[1]["w"].shape == (32, 16, 4, 4)
    assert w_final.shape == (1, 32, 4, 4)

    # layer 1: rows (dy*4+dx)*3+c, cols cout
    w1 = jnp.transpose(blocks[0]["w"], (2, 3, 1, 0)).reshape(48, 16)
    w1p = jnp.pad(w1, ((0, LANES - 48), (0, LANES - 16)))

    # layer 2: 4 row blocks (du, dv); within a block rows 16*(2p+q)+c, cols cout
    blks = []
    for du in (0, 1):
        for dv in (0, 1):
            rows = []
            for p in (0, 1):
                for q in (0, 1):
                    rows.append(jnp.transpose(
                        blocks[1]["w"][:, :, 2 * du + p, 2 * dv + q]))  # (16,32)
            blk = jnp.concatenate(rows, axis=0)                         # (64,32)
            blks.append(jnp.pad(blk, ((0, LANES - 64), (0, LANES - 32))))
    w2p = jnp.concatenate(blks, axis=0)                                 # (512,128)

    # final conv: row = A*4+B, col = channel
    w3 = jnp.transpose(w_final[0], (1, 2, 0)).reshape(16, 32)
    w3p = jnp.pad(w3, ((0, 0), (0, LANES - 32)))

    def pad_vec(v):
        return jnp.pad(v.reshape(1, -1), ((0, 0), (0, LANES - v.shape[0])))

    return {
        "w1": w1p, "g1": pad_vec(blocks[0]["gamma"]), "b1": pad_vec(blocks[0]["beta"]),
        "w2": w2p, "g2": pad_vec(blocks[1]["gamma"]), "b2": pad_vec(blocks[1]["beta"]),
        "w3": w3p,
    }


def _vmem():
    return pl.BlockSpec(memory_space=pltpu.MemorySpace.VMEM)


@jax.jit
def discriminator_forward(x_nchw, packed):
    n = x_nchw.shape[0]
    x1 = _prep_input(x_nchw)
    return pl.pallas_call(
        _fused_discriminator_kernel,
        out_shape=jax.ShapeDtypeStruct((n, 1), jnp.float32),
        in_specs=[_vmem()] * 8,
        out_specs=_vmem(),
        scratch_shapes=[pltpu.VMEM((n, 8, 8, LANES), jnp.float32)],
    )(x1, packed["w1"], packed["g1"], packed["b1"],
      packed["w2"], packed["g2"], packed["b2"], packed["w3"])


# ---------------------------------------------------------------------------
# Parameters (shapes exactly as Discriminator.__init__ builds them)
# ---------------------------------------------------------------------------
def init_params(key, input_size, channels):
    specs = [(channels, input_size)]
    inp = input_size
    real = input_size // 2
    while real > 4:
        out = inp * 2
        specs.append((inp, out))
        inp = out
        real //= 2

    blocks = []
    for (ci, co) in specs:
        key, k1, k2, k3 = jax.random.split(key, 4)
        blocks.append({
            "w": 0.05 * jax.random.normal(k1, (co, ci, 4, 4), jnp.float32),
            "gamma": 1.0 + 0.1 * jax.random.normal(k2, (co,), jnp.float32),
            "beta": 0.1 * jax.random.normal(k3, (co,), jnp.float32),
        })
    key, kf = jax.random.split(key)
    w_final = 0.05 * jax.random.normal(kf, (1, inp, 4, 4), jnp.float32)
    return blocks, w_final


# ---------------------------------------------------------------------------
# Pure-JAX reference (for correctness check)
# ---------------------------------------------------------------------------
def ref_forward(x_nchw, blocks, w_final):
    x = jnp.transpose(x_nchw, (0, 2, 3, 1)).astype(jnp.float32)
    dn = ("NHWC", "HWIO", "NHWC")
    for blk in blocks:
        w = jnp.transpose(blk["w"], (2, 3, 1, 0))
        y = lax.conv_general_dilated(x, w, (2, 2), ((1, 1), (1, 1)),
                                     dimension_numbers=dn)
        mean = jnp.mean(y, axis=(0, 1, 2), keepdims=True)
        var = jnp.mean(jnp.square(y - mean), axis=(0, 1, 2), keepdims=True)
        y = (y - mean) * lax.rsqrt(var + EPS) * blk["gamma"] + blk["beta"]
        x = jnp.where(y >= 0, y, NEG_SLOPE * y)
    w = jnp.transpose(w_final, (2, 3, 1, 0))
    y = lax.conv_general_dilated(x, w, (1, 1), "VALID", dimension_numbers=dn)
    return jax.nn.sigmoid(y.reshape(y.shape[0], -1))


if __name__ == "__main__":
    key = jax.random.PRNGKey(0)
    kx, kp = jax.random.split(key)

    input_size = 16
    channels = 3
    batch = 2

    x = jax.random.normal(kx, (batch, channels, input_size, input_size),
                          jnp.float32)
    blocks, w_final = init_params(kp, input_size, channels)
    packed = pack_params(blocks, w_final)     # one-time weight repacking

    out = discriminator_forward(x, packed)
    out = jax.block_until_ready(out)

    ref = ref_forward(x, blocks, w_final)
    assert out.shape == (batch, 1), out.shape
    assert jnp.allclose(out, ref, atol=1e-4, rtol=1e-4), (out, ref)

    print("KERNEL_OK")
</pallas_src>

<mosaic_0001>
module attributes {stable_mosaic.version = 11 : i64} {
  func.func @_fused_discriminator_kernel(%arg0: memref<128x128xf32, #tpu.memory_space<vmem>>, %arg1: memref<128x128xf32, #tpu.memory_space<vmem>>, %arg2: memref<1x128xf32, #tpu.memory_space<vmem>>, %arg3: memref<1x128xf32, #tpu.memory_space<vmem>>, %arg4: memref<512x128xf32, #tpu.memory_space<vmem>>, %arg5: memref<1x128xf32, #tpu.memory_space<vmem>>, %arg6: memref<1x128xf32, #tpu.memory_space<vmem>>, %arg7: memref<16x128xf32, #tpu.memory_space<vmem>>, %arg8: memref<2x1xf32, #tpu.memory_space<vmem>>, %arg9: memref<2x8x8x128xf32, #tpu.memory_space<vmem>>) attributes {dimension_semantics = [], scalar_prefetch = 0 : i64, scratch_operands = 1 : i64, tpu.core_type = #tpu.core_type<tc>} {
    %c0 = arith.constant 0 : index
    %c0_0 = arith.constant 0 : index
    %0 = vector.load %arg0[%c0, %c0_0] : memref<128x128xf32, #tpu.memory_space<vmem>>, vector<128x128xf32>
    %c0_1 = arith.constant 0 : index
    %c0_2 = arith.constant 0 : index
    %1 = vector.load %arg1[%c0_1, %c0_2] : memref<128x128xf32, #tpu.memory_space<vmem>>, vector<128x128xf32>
    %cst = arith.constant dense<0.000000e+00> : vector<128x128xf32>
    %2 = tpu.matmul %0, %1, %cst {dimension_numbers = #tpu.dot_dimension_numbers<[1], [0], [0], [1], [0, 0, 1, 1], [], []>} : vector<128x128xf32>, vector<128x128xf32>, vector<128x128xf32> -> vector<128x128xf32>
    %cst_3 = arith.constant dense<0.000000e+00> : vector<128xf32>
    %3 = vector.multi_reduction <add>, %2, %cst_3 [0] : vector<128x128xf32> to vector<128xf32>
    %4 = vector.shape_cast %3 : vector<128xf32> to vector<1x128xf32>
    %cst_4 = arith.constant 7.812500e-03 : f32
    %5 = vector.broadcast %cst_4 : f32 to vector<1x128xf32>
    %6 = arith.mulf %4, %5 : vector<1x128xf32>
    %7 = vector.broadcast %6 : vector<1x128xf32> to vector<128x128xf32>
    %8 = arith.subf %2, %7 : vector<128x128xf32>
    %9 = arith.mulf %8, %8 : vector<128x128xf32>
    %cst_5 = arith.constant dense<0.000000e+00> : vector<128xf32>
    %10 = vector.multi_reduction <add>, %9, %cst_5 [0] : vector<128x128xf32> to vector<128xf32>
    %11 = vector.shape_cast %10 : vector<128xf32> to vector<1x128xf32>
    %cst_6 = arith.constant 7.812500e-03 : f32
    %12 = vector.broadcast %cst_6 : f32 to vector<1x128xf32>
    %13 = arith.mulf %11, %12 : vector<1x128xf32>
    %c0_7 = arith.constant 0 : index
    %c0_8 = arith.constant 0 : index
    %14 = vector.load %arg2[%c0_7, %c0_8] : memref<1x128xf32, #tpu.memory_space<vmem>>, vector<1x128xf32>
    %cst_9 = arith.constant 9.99999974E-6 : f32
    %15 = vector.broadcast %cst_9 : f32 to vector<1x128xf32>
    %16 = arith.addf %13, %15 : vector<1x128xf32>
    %17 = math.rsqrt %16 : vector<1x128xf32>
    %18 = arith.mulf %14, %17 : vector<1x128xf32>
    %19 = vector.broadcast %18 : vector<1x128xf32> to vector<128x128xf32>
    %20 = arith.mulf %8, %19 : vector<128x128xf32>
    %c0_10 = arith.constant 0 : index
    %c0_11 = arith.constant 0 : index
    %21 = vector.load %arg3[%c0_10, %c0_11] : memref<1x128xf32, #tpu.memory_space<vmem>>, vector<1x128xf32>
    %22 = vector.broadcast %21 : vector<1x128xf32> to vector<128x128xf32>
    %23 = arith.addf %20, %22 : vector<128x128xf32>
    %cst_12 = arith.constant 0.000000e+00 : f32
    %24 = vector.broadcast %cst_12 : f32 to vector<128x128xf32>
    %25 = arith.cmpf oge, %23, %24 : vector<128x128xf32>
    %cst_13 = arith.constant 2.000000e-01 : f32
    %26 = vector.broadcast %cst_13 : f32 to vector<128x128xf32>
    %27 = arith.mulf %26, %23 : vector<128x128xf32>
    %28 = arith.select %25, %23, %27 : vector<128x128xi1>, vector<128x128xf32>
    %cst_14 = arith.constant 0.000000e+00 : f32
    %29 = vector.broadcast %cst_14 : f32 to vector<2x5x8x128xf32>
    %c0_15 = arith.constant 0 : index
    %c0_16 = arith.constant 0 : index
    %c0_17 = arith.constant 0 : index
    %c0_18 = arith.constant 0 : index
    %30 = vector.load %arg9[%c0_15, %c0_16, %c0_17, %c0_18] : memref<2x8x8x128xf32, #tpu.memory_space<vmem>>, vector<2x5x8x128xf32>
    tpu.vector_store %arg9[%c0_15, %c0_16, %c0_17, %c0_18], %29 {strides = array<i32>} : memref<2x8x8x128xf32, #tpu.memory_space<vmem>>, vector<2x5x8x128xf32>,
    %31 = vector.extract_strided_slice %28 {offsets = [0, 0], sizes = [32, 128], strides = [1, 1]} : vector<128x128xf32> to vector<32x128xf32>
    %c0_19 = arith.constant 0 : index
    %c1 = arith.constant 1 : index
    %c1_20 = arith.constant 1 : index
    %c0_21 = arith.constant 0 : index
    %32 = vector.load %arg9[%c0_19, %c1, %c1_20, %c0_21] : memref<2x8x8x128xf32, #tpu.memory_space<vmem>>, vector<2x4x4x128xf32>
    %33 = vector.shape_cast %31 : vector<32x128xf32> to vector<2x4x4x128xf32>
    %34 = arith.addf %32, %33 : vector<2x4x4x128xf32>
    %c0_22 = arith.constant 0 : index
    %c1_23 = arith.constant 1 : index
    %c1_24 = arith.constant 1 : index
    %c0_25 = arith.constant 0 : index
    %35 = vector.load %arg9[%c0_22, %c1_23, %c1_24, %c0_25] : memref<2x8x8x128xf32, #tpu.memory_space<vmem>>, vector<2x4x4x128xf32>
    tpu.vector_store %arg9[%c0_22, %c1_23, %c1_24, %c0_25], %34 {strides = array<i32>} : memref<2x8x8x128xf32, #tpu.memory_space<vmem>>, vector<2x4x4x128xf32>,
    %36 = vector.extract_strided_slice %28 {offsets = [32, 0], sizes = [32, 128], strides = [1, 1]} : vector<128x128xf32> to vector<32x128xf32>
    %c16_i32 = arith.constant 16 : i32
    %37 = tpu.dynamic_rotate %36 by %c16_i32 dim 1 : vector<32x128xf32>, i32 -> vector<32x128xf32>
    %c0_26 = arith.constant 0 : index
    %c1_27 = arith.constant 1 : index
    %c0_28 = arith.constant 0 : index
    %c0_29 = arith.constant 0 : index
    %38 = vector.load %arg9[%c0_26, %c1_27, %c0_28, %c0_29] : memref<2x8x8x128xf32, #tpu.memory_space<vmem>>, vector<2x4x4x128xf32>
    %39 = vector.shape_cast %37 : vector<32x128xf32> to vector<2x4x4x128xf32>
    %40 = arith.addf %38, %39 : vector<2x4x4x128xf32>
    %c0_30 = arith.constant 0 : index
    %c1_31 = arith.constant 1 : index
    %c0_32 = arith.constant 0 : index
    %c0_33 = arith.constant 0 : index
    %41 = vector.load %arg9[%c0_30, %c1_31, %c0_32, %c0_33] : memref<2x8x8x128xf32, #tpu.memory_space<vmem>>, vector<2x4x4x128xf32>
    tpu.vector_store %arg9[%c0_30, %c1_31, %c0_32, %c0_33], %40 {strides = array<i32>} : memref<2x8x8x128xf32, #tpu.memory_space<vmem>>, vector<2x4x4x128xf32>,
    %42 = vector.extract_strided_slice %28 {offsets = [64, 0], sizes = [32, 128], strides = [1, 1]} : vector<128x128xf32> to vector<32x128xf32>
    %c32_i32 = arith.constant 32 : i32
    %43 = tpu.dynamic_rotate %42 by %c32_i32 dim 1 : vector<32x128xf32>, i32 -> vector<32x128xf32>
    %c0_34 = arith.constant 0 : index
    %c0_35 = arith.constant 0 : index
    %c1_36 = arith.constant 1 : index
    %c0_37 = arith.constant 0 : index
    %44 = vector.load %arg9[%c0_34, %c0_35, %c1_36, %c0_37] : memref<2x8x8x128xf32, #tpu.memory_space<vmem>>, vector<2x4x4x128xf32>
    %45 = vector.shape_cast %43 : vector<32x128xf32> to vector<2x4x4x128xf32>
    %46 = arith.addf %44, %45 : vector<2x4x4x128xf32>
    %c0_38 = arith.constant 0 : index
    %c0_39 = arith.constant 0 : index
    %c1_40 = arith.constant 1 : index
    %c0_41 = arith.constant 0 : index
    %47 = vector.load %arg9[%c0_38, %c0_39, %c1_40, %c0_41] : memref<2x8x8x128xf32, #tpu.memory_space<vmem>>, vector<2x4x4x128xf32>
    tpu.vector_store %arg9[%c0_38, %c0_39, %c1_40, %c0_41], %46 {strides = array<i32>} : memref<2x8x8x128xf32, #tpu.memory_space<vmem>>, vector<2x4x4x128xf32>,
    %48 = vector.extract_strided_slice %28 {offsets = [96, 0], sizes = [32, 128], strides = [1, 1]} : vector<128x128xf32> to vector<32x128xf32>
    %c48_i32 = arith.constant 48 : i32
    %49 = tpu.dynamic_rotate %48 by %c48_i32 dim 1 : vector<32x128xf32>, i32 -> vector<32x128xf32>
    %c0_42 = arith.constant 0 : index
    %c0_43 = arith.constant 0 : index
    %c0_44 = arith.constant 0 : index
    %c0_45 = arith.constant 0 : index
    %50 = vector.load %arg9[%c0_42, %c0_43, %c0_44, %c0_45] : memref<2x8x8x128xf32, #tpu.memory_space<vmem>>, vector<2x4x4x128xf32>
    %51 = vector.shape_cast %49 : vector<32x128xf32> to vector<2x4x4x128xf32>
    %52 = arith.addf %50, %51 : vector<2x4x4x128xf32>
    %c0_46 = arith.constant 0 : index
    %c0_47 = arith.constant 0 : index
    %c0_48 = arith.constant 0 : index
    %c0_49 = arith.constant 0 : index
    %53 = vector.load %arg9[%c0_46, %c0_47, %c0_48, %c0_49] : memref<2x8x8x128xf32, #tpu.memory_space<vmem>>, vector<2x4x4x128xf32>
    tpu.vector_store %arg9[%c0_46, %c0_47, %c0_48, %c0_49], %52 {strides = array<i32>} : memref<2x8x8x128xf32, #tpu.memory_space<vmem>>, vector<2x4x4x128xf32>,
    %c0_50 = arith.constant 0 : index
    %c0_51 = arith.constant 0 : index
    %c0_52 = arith.constant 0 : index
    %c0_53 = arith.constant 0 : index
    %54 = vector.load %arg9[%c0_50, %c0_51, %c0_52, %c0_53] : memref<2x8x8x128xf32, #tpu.memory_space<vmem>>, vector<2x4x4x128xf32>
    %55 = vector.shape_cast %54 : vector<2x4x4x128xf32> to vector<32x128xf32>
    %c0_54 = arith.constant 0 : index
    %c0_55 = arith.constant 0 : index
    %56 = vector.load %arg4[%c0_54, %c0_55] : memref<512x128xf32, #tpu.memory_space<vmem>>, vector<128x128xf32>
    %cst_56 = arith.constant dense<0.000000e+00> : vector<32x128xf32>
    %57 = tpu.matmul %55, %56, %cst_56 {dimension_numbers = #tpu.dot_dimension_numbers<[1], [0], [0], [1], [0, 0, 1, 1], [], []>} : vector<32x128xf32>, vector<128x128xf32>, vector<32x128xf32> -> vector<32x128xf32>
    %c0_57 = arith.constant 0 : index
    %c0_58 = arith.constant 0 : index
    %c1_59 = arith.constant 1 : index
    %c0_60 = arith.constant 0 : index
    %58 = vector.load %arg9[%c0_57, %c0_58, %c1_59, %c0_60] : memref<2x8x8x128xf32, #tpu.memory_space<vmem>>, vector<2x4x4x128xf32>
    %59 = vector.shape_cast %58 : vector<2x4x4x128xf32> to vector<32x128xf32>
    %c128 = arith.constant 128 : index
    %c0_61 = arith.constant 0 : index
    %60 = vector.load %arg4[%c128, %c0_61] : memref<512x128xf32, #tpu.memory_space<vmem>>, vector<128x128xf32>
    %cst_62 = arith.constant dense<0.000000e+00> : vector<32x128xf32>
    %61 = tpu.matmul %59, %60, %cst_62 {dimension_numbers = #tpu.dot_dimension_numbers<[1], [0], [0], [1], [0, 0, 1, 1], [], []>} : vector<32x128xf32>, vector<128x128xf32>, vector<32x128xf32> -> vector<32x128xf32>
    %62 = arith.addf %57, %61 : vector<32x128xf32>
    %c0_63 = arith.constant 0 : index
    %c1_64 = arith.constant 1 : index
    %c0_65 = arith.constant 0 : index
    %c0_66 = arith.constant 0 : index
    %63 = vector.load %arg9[%c0_63, %c1_64, %c0_65, %c0_66] : memref<2x8x8x128xf32, #tpu.memory_space<vmem>>, vector<2x4x4x128xf32>
    %64 = vector.shape_cast %63 : vector<2x4x4x128xf32> to vector<32x128xf32>
    %c256 = arith.constant 256 : index
    %c0_67 = arith.constant 0 : index
    %65 = vector.load %arg4[%c256, %c0_67] : memref<512x128xf32, #tpu.memory_space<vmem>>, vector<128x128xf32>
    %cst_68 = arith.constant dense<0.000000e+00> : vector<32x128xf32>
    %66 = tpu.matmul %64, %65, %cst_68 {dimension_numbers = #tpu.dot_dimension_numbers<[1], [0], [0], [1], [0, 0, 1, 1], [], []>} : vector<32x128xf32>, vector<128x128xf32>, vector<32x128xf32> -> vector<32x128xf32>
    %67 = arith.addf %62, %66 : vector<32x128xf32>
    %c0_69 = arith.constant 0 : index
    %c1_70 = arith.constant 1 : index
    %c1_71 = arith.constant 1 : index
    %c0_72 = arith.constant 0 : index
    %68 = vector.load %arg9[%c0_69, %c1_70, %c1_71, %c0_72] : memref<2x8x8x128xf32, #tpu.memory_space<vmem>>, vector<2x4x4x128xf32>
    %69 = vector.shape_cast %68 : vector<2x4x4x128xf32> to vector<32x128xf32>
    %c384 = arith.constant 384 : index
    %c0_73 = arith.constant 0 : index
    %70 = vector.load %arg4[%c384, %c0_73] : memref<512x128xf32, #tpu.memory_space<vmem>>, vector<128x128xf32>
    %cst_74 = arith.constant dense<0.000000e+00> : vector<32x128xf32>
    %71 = tpu.matmul %69, %70, %cst_74 {dimension_numbers = #tpu.dot_dimension_numbers<[1], [0], [0], [1], [0, 0, 1, 1], [], []>} : vector<32x128xf32>, vector<128x128xf32>, vector<32x128xf32> -> vector<32x128xf32>
    %72 = arith.addf %67, %71 : vector<32x128xf32>
    %cst_75 = arith.constant dense<0.000000e+00> : vector<128xf32>
    %73 = vector.multi_reduction <add>, %72, %cst_75 [0] : vector<32x128xf32> to vector<128xf32>
    %74 = vector.shape_cast %73 : vector<128xf32> to vector<1x128xf32>
    %cst_76 = arith.constant 3.125000e-02 : f32
    %75 = vector.broadcast %cst_76 : f32 to vector<1x128xf32>
    %76 = arith.mulf %74, %75 : vector<1x128xf32>
    %77 = vector.broadcast %76 : vector<1x128xf32> to vector<32x128xf32>
    %78 = arith.subf %72, %77 : vector<32x128xf32>
    %79 = arith.mulf %78, %78 : vector<32x128xf32>
    %cst_77 = arith.constant dense<0.000000e+00> : vector<128xf32>
    %80 = vector.multi_reduction <add>, %79, %cst_77 [0] : vector<32x128xf32> to vector<128xf32>
    %81 = vector.shape_cast %80 : vector<128xf32> to vector<1x128xf32>
    %cst_78 = arith.constant 3.125000e-02 : f32
    %82 = vector.broadcast %cst_78 : f32 to vector<1x128xf32>
    %83 = arith.mulf %81, %82 : vector<1x128xf32>
    %c0_79 = arith.constant 0 : index
    %c0_80 = arith.constant 0 : index
    %84 = vector.load %arg5[%c0_79, %c0_80] : memref<1x128xf32, #tpu.memory_space<vmem>>, vector<1x128xf32>
    %cst_81 = arith.constant 9.99999974E-6 : f32
    %85 = vector.broadcast %cst_81 : f32 to vector<1x128xf32>
    %86 = arith.addf %83, %85 : vector<1x128xf32>
    %87 = math.rsqrt %86 : vector<1x128xf32>
    %88 = arith.mulf %84, %87 : vector<1x128xf32>
    %89 = vector.broadcast %88 : vector<1x128xf32> to vector<32x128xf32>
    %90 = arith.mulf %78, %89 : vector<32x128xf32>
    %c0_82 = arith.constant 0 : index
    %c0_83 = arith.constant 0 : index
    %91 = vector.load %arg6[%c0_82, %c0_83] : memref<1x128xf32, #tpu.memory_space<vmem>>, vector<1x128xf32>
    %92 = vector.broadcast %91 : vector<1x128xf32> to vector<32x128xf32>
    %93 = arith.addf %90, %92 : vector<32x128xf32>
    %cst_84 = arith.constant 0.000000e+00 : f32
    %94 = vector.broadcast %cst_84 : f32 to vector<32x128xf32>
    %95 = arith.cmpf oge, %93, %94 : vector<32x128xf32>
    %cst_85 = arith.constant 2.000000e-01 : f32
    %96 = vector.broadcast %cst_85 : f32 to vector<32x128xf32>
    %97 = arith.mulf %96, %93 : vector<32x128xf32>
    %98 = arith.select %95, %93, %97 : vector<32x128xi1>, vector<32x128xf32>
    %99 = vector.shape_cast %98 : vector<32x128xf32> to vector<2x16x128xf32>
    %c0_86 = arith.constant 0 : index
    %c0_87 = arith.constant 0 : index
    %100 = vector.load %arg7[%c0_86, %c0_87] : memref<16x128xf32, #tpu.memory_space<vmem>>, vector<16x128xf32>
    %101 = vector.shape_cast %100 : vector<16x128xf32> to vector<1x16x128xf32>
    %102 = vector.broadcast %101 : vector<1x16x128xf32> to vector<2x16x128xf32>
    %103 = arith.mulf %99, %102 : vector<2x16x128xf32>
    %cst_88 = arith.constant dense<0.000000e+00> : vector<2x16xf32>
    %104 = vector.multi_reduction <add>, %103, %cst_88 [2] : vector<2x16x128xf32> to vector<2x16xf32>
    %cst_89 = arith.constant dense<0.000000e+00> : vector<2xf32>
    %105 = vector.multi_reduction <add>, %104, %cst_89 [1] : vector<2x16xf32> to vector<2xf32>
    %106 = vector.shape_cast %105 : vector<2xf32> to vector<2x1xf32>
    %107 = arith.negf %106 : vector<2x1xf32>
    %108 = math.exp %107 : vector<2x1xf32>
    %cst_90 = arith.constant 1.000000e+00 : f32
    %109 = vector.broadcast %cst_90 : f32 to vector<2x1xf32>
    %110 = arith.addf %109, %108 : vector<2x1xf32>
    %111 = arith.divf %109, %110 : vector<2x1xf32>
    %c0_91 = arith.constant 0 : index
    %c0_92 = arith.constant 0 : index
    %112 = vector.load %arg8[%c0_91, %c0_92] : memref<2x1xf32, #tpu.memory_space<vmem>>, vector<2x1xf32>
    tpu.vector_store %arg8[%c0_91, %c0_92], %111 {strides = array<i32>} : memref<2x1xf32, #tpu.memory_space<vmem>>, vector<2x1xf32>,
    return
  }
}

</mosaic_0001>

<llo_original>
// kernel: discriminator_forward.1
$region0: #{discriminator_forward.1}
  #allocation0 [shape = 'u32[]', space=smem, size = 0x4, offset = 0x4, fixed_abs, tag = 'smem constant byte address 0x4 - core index']
  #allocation1 [shape = 'u32[144,128]{1,0:T(1,128)}', space=vmem, size = 0x12000, scoped, tag = 'internal scratch']
  #allocation2 [shape = 'f32[2,8,8,128]{3,2,1,0:T(8,128)}', space=vmem, size = 0x10000, scoped, tag = 'scratch operand']
  %s0 = inlined_call_operand.vmem [shape: f32[128,128], index: 0, kind: input, shape index: {}]
  %s1 = inlined_call_operand.vmem [shape: f32[128,128], index: 1, kind: input, shape index: {}]
  %s2 = inlined_call_operand.vmem [shape: f32[1,128], index: 2, kind: input, shape index: {}]
  %s3 = inlined_call_operand.vmem [shape: f32[1,128], index: 3, kind: input, shape index: {}]
  %s4 = inlined_call_operand.vmem [shape: f32[512,128], index: 4, kind: input, shape index: {}]
  %s5 = inlined_call_operand.vmem [shape: f32[1,128], index: 5, kind: input, shape index: {}]
  %s6 = inlined_call_operand.vmem [shape: f32[1,128], index: 6, kind: input, shape index: {}]
  %s7 = inlined_call_operand.vmem [shape: f32[16,128], index: 7, kind: input, shape index: {}]
  %s8 = inlined_call_operand.vmem [shape: f32[2,1], index: 8, kind: output, shape index: {}]
  %s9 = sld [smem:[#allocation0]]
  $region42: #{discriminator_forward.1} parent=0
    _
  %s11 = ssub.s32 1, %s9
  %s12 = scalar_select 0, %s11, %s9
  // Predicated region
  $region2: #{discriminator_forward.1} parent=0 // pred_check
    _
  $region3: #{discriminator_forward.1} parent=0 // pred_check_branch
    %14 = sbr.rel (0) target = $region5
  $region4: #{discriminator_forward.1} parent=0 // pred_region
    _
  $region5: #{discriminator_forward.1} parent=0 // pred_fallthru
    _
  // Predicated region
  $region6: #{discriminator_forward.1} parent=0 // pred_check
    _
  $region7: #{discriminator_forward.1} parent=0 // pred_check_branch
    %16 = sbr.rel (0) target = $region9
  $region8: #{discriminator_forward.1} parent=0 // pred_region
    _
  $region9: #{discriminator_forward.1} parent=0 // pred_fallthru
    _
  // Predicated region
  $region10: #{discriminator_forward.1} parent=0 // pred_check
    _
  $region11: #{discriminator_forward.1} parent=0 // pred_check_branch
    %18 = sbr.rel (0) target = $region13
  $region12: #{discriminator_forward.1} parent=0 // pred_region
    _
  $region13: #{discriminator_forward.1} parent=0 // pred_fallthru
    _
  // Predicated region
  $region14: #{discriminator_forward.1} parent=0 // pred_check
    _
  $region15: #{discriminator_forward.1} parent=0 // pred_check_branch
    %20 = sbr.rel (0) target = $region17
  $region16: #{discriminator_forward.1} parent=0 // pred_region
    _
  $region17: #{discriminator_forward.1} parent=0 // pred_fallthru
    _
  // Predicated region
  $region18: #{discriminator_forward.1} parent=0 // pred_check
    _
  $region19: #{discriminator_forward.1} parent=0 // pred_check_branch
    %22 = sbr.rel (0) target = $region21
  $region20: #{discriminator_forward.1} parent=0 // pred_region
    _
  $region21: #{discriminator_forward.1} parent=0 // pred_fallthru
    _
  // Predicated region
  $region22: #{discriminator_forward.1} parent=0 // pred_check
    _
  $region23: #{discriminator_forward.1} parent=0 // pred_check_branch
    %24 = sbr.rel (0) target = $region25
  $region24: #{discriminator_forward.1} parent=0 // pred_region
    _
  $region25: #{discriminator_forward.1} parent=0 // pred_fallthru
    _
  // Predicated region
  $region26: #{discriminator_forward.1} parent=0 // pred_check
    _
  $region27: #{discriminator_forward.1} parent=0 // pred_check_branch
    %26 = sbr.rel (0) target = $region29
  $region28: #{discriminator_forward.1} parent=0 // pred_region
    _
  $region29: #{discriminator_forward.1} parent=0 // pred_fallthru
    _
  // Predicated region
  $region30: #{discriminator_forward.1} parent=0 // pred_check
    _
  $region31: #{discriminator_forward.1} parent=0 // pred_check_branch
    %28 = sbr.rel (0) target = $region33
  $region32: #{discriminator_forward.1} parent=0 // pred_region
    _
  $region33: #{discriminator_forward.1} parent=0 // pred_fallthru
    _
  %v29 = vld [vmem:[%s0] sm:$0xff]
  %v30 = vld [vmem:[%s0 + $0x8] sm:$0xff]
  %v31 = vld [vmem:[%s0 + $0x10] sm:$0xff]
  %v32 = vld [vmem:[%s0 + $0x18] sm:$0xff]
  %v33 = vld [vmem:[%s0 + $0x20] sm:$0xff]
  %v34 = vld [vmem:[%s0 + $0x28] sm:$0xff]
  %v35 = vld [vmem:[%s0 + $0x30] sm:$0xff]
  %v36 = vld [vmem:[%s0 + $0x38] sm:$0xff]
  %v37 = vld [vmem:[%s0 + $0x40] sm:$0xff]
  %v38 = vld [vmem:[%s0 + $0x48] sm:$0xff]
  %v39 = vld [vmem:[%s0 + $0x50] sm:$0xff]
  %v40 = vld [vmem:[%s0 + $0x58] sm:$0xff]
  %v41 = vld [vmem:[%s0 + $0x60] sm:$0xff]
  %v42 = vld [vmem:[%s0 + $0x68] sm:$0xff]
  %v43 = vld [vmem:[%s0 + $0x70] sm:$0xff]
  %v44 = vld [vmem:[%s0 + $0x78] sm:$0xff]
  %v45 = vld [vmem:[%s1] sm:$0xff]
  %v46 = vld [vmem:[%s1 + $0x8] sm:$0xff]
  %v47 = vld [vmem:[%s1 + $0x10] sm:$0xff]
  %v48 = vld [vmem:[%s1 + $0x18] sm:$0xff]
  %v49 = vld [vmem:[%s1 + $0x20] sm:$0xff]
  %v50 = vld [vmem:[%s1 + $0x28] sm:$0xff]
  %v51 = vld [vmem:[%s1 + $0x30] sm:$0xff]
  %v52 = vld [vmem:[%s1 + $0x38] sm:$0xff]
  %v53 = vld [vmem:[%s1 + $0x40] sm:$0xff]
  %v54 = vld [vmem:[%s1 + $0x48] sm:$0xff]
  %v55 = vld [vmem:[%s1 + $0x50] sm:$0xff]
  %v56 = vld [vmem:[%s1 + $0x58] sm:$0xff]
  %v57 = vld [vmem:[%s1 + $0x60] sm:$0xff]
  %v58 = vld [vmem:[%s1 + $0x68] sm:$0xff]
  %v59 = vld [vmem:[%s1 + $0x70] sm:$0xff]
  %v60 = vld [vmem:[%s1 + $0x78] sm:$0xff]
  %61 = vmatprep.subr.mxu0 0.0
  %62 = vmatpush1.msra.mxu0 %v45
  %63 = vmatprep.subr.mxu0 0.0
  %64 = vmatpush1.msra.mxu0 %v46
  %65 = vmatprep.subr.mxu0 0.0
  %66 = vmatpush1.msra.mxu0 %v47
  %67 = vmatprep.subr.mxu0 0.0
  %68 = vmatpush1.msra.mxu0 %v48
  %69 = vmatprep.subr.mxu0 0.0
  %70 = vmatpush1.msra.mxu0 %v49
  %71 = vmatprep.subr.mxu0 0.0
  %72 = vmatpush1.msra.mxu0 %v50
  %73 = vmatprep.subr.mxu0 0.0
  %74 = vmatpush1.msra.mxu0 %v51
  %75 = vmatprep.subr.mxu0 0.0
  %76 = vmatpush1.msra.mxu0 %v52
  %77 = vmatprep.subr.mxu0 0.0
  %78 = vmatpush1.msra.mxu0 %v53
  %79 = vmatprep.subr.mxu0 0.0
  %80 = vmatpush1.msra.mxu0 %v54
  %81 = vmatprep.subr.mxu0 0.0
  %82 = vmatpush1.msra.mxu0 %v55
  %83 = vmatprep.subr.mxu0 0.0
  %84 = vmatpush1.msra.mxu0 %v56
  %85 = vmatprep.subr.mxu0 0.0
  %86 = vmatpush1.msra.mxu0 %v57
  %87 = vmatprep.subr.mxu0 0.0
  %88 = vmatpush1.msra.mxu0 %v58
  %89 = vmatprep.subr.mxu0 0.0
  %90 = vmatpush1.msra.mxu0 %v59
  %91 = vmatprep.subr.mxu0 0.0
  %92 = vmatpush1.msra.mxu0 %v60
  %93 = vmatprep.subr.mxu0 0.0
  %94 = vmatpush1.msra.mxu0 0.0
  %95 = vmatprep.subr.mxu0 0.0
  %96 = vmatpush1.msra.mxu0 0.0
  %97 = vmatprep.subr.mxu0 0.0
  %98 = vmatpush1.msra.mxu0 0.0
  %99 = vmatprep.subr.mxu0 0.0
  %100 = vmatpush1.msra.mxu0 0.0
  %101 = vmatprep.subr.mxu0 0.0
  %102 = vmatpush1.msra.mxu0 0.0
  %103 = vmatprep.subr.mxu0 0.0
  %104 = vmatpush1.msra.mxu0 0.0
  %105 = vmatprep.subr.mxu0 0.0
  %106 = vmatpush1.msra.mxu0 0.0
  %107 = vmatprep.subr.mxu0 0.0
  %108 = vmatpush1.msra.mxu0 0.0
  %109 = vmatprep.subr.mxu0 0.0
  %110 = vmatpush1.msra.mxu0 0.0
  %111 = vmatprep.subr.mxu0 0.0
  %112 = vmatpush1.msra.mxu0 0.0
  %113 = vmatprep.subr.mxu0 0.0
  %114 = vmatpush1.msra.mxu0 0.0
  %115 = vmatprep.subr.mxu0 0.0
  %116 = vmatpush1.msra.mxu0 0.0
  %117 = vmatprep.subr.mxu0 0.0
  %118 = vmatpush1.msra.mxu0 0.0
  %119 = vmatprep.subr.mxu0 0.0
  %120 = vmatpush1.msra.mxu0 0.0
  %121 = vmatprep.subr.mxu0 0.0
  %122 = vmatpush1.msra.mxu0 0.0
  %123 = vmatprep.subr.mxu0 0.0
  %124 = vmatpush1.msra.mxu0 0.0
  %125 = vmatprep.mubr.f32.mxu0 0.0
  %126 = vmatmul.mubr.f32.gmra.mrb[0].mxu0 %v29
  %v127 = vpop.f32.mrb[0].mxu0
  %v128 = vadd.f32 0.0, %v127
  %v129 = vpop.f32.mrb[0].mxu0
  %130 = vmatprep.mubr.f32.mxu0 0.0
  %131 = vmatmul.mubr.f32.gmra.mrb[0].mxu0 %v30
  %v132 = vpop.f32.mrb[0].mxu0
  %v133 = vadd.f32 0.0, %v132
  %v134 = vpop.f32.mrb[0].mxu0
  %135 = vmatprep.mubr.f32.mxu0 0.0
  %136 = vmatmul.mubr.f32.gmra.mrb[0].mxu0 %v31
  %v137 = vpop.f32.mrb[0].mxu0
  %v138 = vadd.f32 0.0, %v137
  %v139 = vpop.f32.mrb[0].mxu0
  %140 = vmatprep.mubr.f32.mxu0 0.0
  %141 = vmatmul.mubr.f32.gmra.mrb[0].mxu0 %v32
  %v142 = vpop.f32.mrb[0].mxu0
  %v143 = vadd.f32 0.0, %v142
  %v144 = vpop.f32.mrb[0].mxu0
  %145 = vmatprep.mubr.f32.mxu0 0.0
  %146 = vmatmul.mubr.f32.gmra.mrb[0].mxu0 %v33
  %v147 = vpop.f32.mrb[0].mxu0
  %v148 = vadd.f32 0.0, %v147
  %v149 = vpop.f32.mrb[0].mxu0
  %150 = vmatprep.mubr.f32.mxu0 0.0
  %151 = vmatmul.mubr.f32.gmra.mrb[0].mxu0 %v34
  %v152 = vpop.f32.mrb[0].mxu0
  %v153 = vadd.f32 0.0, %v152
  %v154 = vpop.f32.mrb[0].mxu0
  %155 = vmatprep.mubr.f32.mxu0 0.0
  %156 = vmatmul.mubr.f32.gmra.mrb[0].mxu0 %v35
  %v157 = vpop.f32.mrb[0].mxu0
  %v158 = vadd.f32 0.0, %v157
  %v159 = vpop.f32.mrb[0].mxu0
  %160 = vmatprep.mubr.f32.mxu0 0.0
  %161 = vmatmul.mubr.f32.gmra.mrb[0].mxu0 %v36
  %v162 = vpop.f32.mrb[0].mxu0
  %v163 = vadd.f32 0.0, %v162
  %v164 = vpop.f32.mrb[0].mxu0
  %165 = vmatprep.mubr.f32.mxu0 0.0
  %166 = vmatmul.mubr.f32.gmra.mrb[0].mxu0 %v37
  %v167 = vpop.f32.mrb[0].mxu0
  %v168 = vadd.f32 0.0, %v167
  %v169 = vpop.f32.mrb[0].mxu0
  %170 = vmatprep.mubr.f32.mxu0 0.0
  %171 = vmatmul.mubr.f32.gmra.mrb[0].mxu0 %v38
  %v172 = vpop.f32.mrb[0].mxu0
  %v173 = vadd.f32 0.0, %v172
  %v174 = vpop.f32.mrb[0].mxu0
  %175 = vmatprep.mubr.f32.mxu0 0.0
  %176 = vmatmul.mubr.f32.gmra.mrb[0].mxu0 %v39
  %v177 = vpop.f32.mrb[0].mxu0
  %v178 = vadd.f32 0.0, %v177
  %v179 = vpop.f32.mrb[0].mxu0
  %180 = vmatprep.mubr.f32.mxu0 0.0
  %181 = vmatmul.mubr.f32.gmra.mrb[0].mxu0 %v40
  %v182 = vpop.f32.mrb[0].mxu0
  %v183 = vadd.f32 0.0, %v182
  %v184 = vpop.f32.mrb[0].mxu0
  %185 = vmatprep.mubr.f32.mxu0 0.0
  %186 = vmatmul.mubr.f32.gmra.mrb[0].mxu0 %v41
  %v187 = vpop.f32.mrb[0].mxu0
  %v188 = vadd.f32 0.0, %v187
  %v189 = vpop.f32.mrb[0].mxu0
  %190 = vmatprep.mubr.f32.mxu0 0.0
  %191 = vmatmul.mubr.f32.gmra.mrb[0].mxu0 %v42
  %v192 = vpop.f32.mrb[0].mxu0
  %v193 = vadd.f32 0.0, %v192
  %v194 = vpop.f32.mrb[0].mxu0
  %195 = vmatprep.mubr.f32.mxu0 0.0
  %196 = vmatmul.mubr.f32.gmra.mrb[0].mxu0 %v43
  %v197 = vpop.f32.mrb[0].mxu0
  %v198 = vadd.f32 0.0, %v197
  %v199 = vpop.f32.mrb[0].mxu0
  %200 = vmatprep.mubr.f32.mxu0 0.0
  %201 = vmatmul.mubr.f32.gmra.mrb[0].mxu0 %v44
  %v202 = vpop.f32.mrb[0].mxu0
  %v203 = vadd.f32 0.0, %v202
  %v204 = vpop.f32.mrb[0].mxu0
  %205 = vdwg.mxu0
  %v206 = vadd.f32 %v128, %v133
  %v207 = vadd.f32 %v206, %v138
  %v208 = vadd.f32 %v207, %v143
  %v209 = vadd.f32 %v208, %v148
  %v210 = vadd.f32 %v209, %v153
  %v211 = vadd.f32 %v210, %v158
  %v212 = vadd.f32 %v211, %v163
  %v213 = vadd.f32 %v212, %v168
  %v214 = vadd.f32 %v213, %v173
  %v215 = vadd.f32 %v214, %v178
  %v216 = vadd.f32 %v215, %v183
  %v217 = vadd.f32 %v216, %v188
  %v218 = vadd.f32 %v217, %v193
  %v219 = vadd.f32 %v218, %v198
  %v220 = vadd.f32 %v219, %v203
  %v221 = vrot.slane %v220, 4
  %v222 = vadd.f32 %v220, %v221
  %v223 = vrot.slane %v222, 2
  %v224 = vadd.f32 %v222, %v223
  %v225 = vrot.slane %v224, 1
  %v226 = vadd.f32 %v224, %v225
  %v227 = vmul.f32 %v226, 0.0078125
  %v228 = vsub.f32 %v128, %v227
  %v229 = vsub.f32 %v133, %v227
  %v230 = vsub.f32 %v138, %v227
  %v231 = vsub.f32 %v143, %v227
  %v232 = vsub.f32 %v148, %v227
  %v233 = vsub.f32 %v153, %v227
  %v234 = vsub.f32 %v158, %v227
  %v235 = vsub.f32 %v163, %v227
  %v236 = vsub.f32 %v168, %v227
  %v237 = vsub.f32 %v173, %v227
  %v238 = vsub.f32 %v178, %v227
  %v239 = vsub.f32 %v183, %v227
  %v240 = vsub.f32 %v188, %v227
  %v241 = vsub.f32 %v193, %v227
  %v242 = vsub.f32 %v198, %v227
  %v243 = vsub.f32 %v203, %v227
  %v244 = vmul.f32 %v228, %v228
  %v245 = vmul.f32 %v229, %v229
  %v246 = vmul.f32 %v230, %v230
  %v247 = vmul.f32 %v231, %v231
  %v248 = vmul.f32 %v232, %v232
  %v249 = vmul.f32 %v233, %v233
  %v250 = vmul.f32 %v234, %v234
  %v251 = vmul.f32 %v235, %v235
  %v252 = vmul.f32 %v236, %v236
  %v253 = vmul.f32 %v237, %v237
  %v254 = vmul.f32 %v238, %v238
  %v255 = vmul.f32 %v239, %v239
  %v256 = vmul.f32 %v240, %v240
  %v257 = vmul.f32 %v241, %v241
  %v258 = vmul.f32 %v242, %v242
  %v259 = vmul.f32 %v243, %v243
  %v260 = vadd.f32 %v244, %v245
  %v261 = vadd.f32 %v260, %v246
  %v262 = vadd.f32 %v261, %v247
  %v263 = vadd.f32 %v262, %v248
  %v264 = vadd.f32 %v263, %v249
  %v265 = vadd.f32 %v264, %v250
  %v266 = vadd.f32 %v265, %v251
  %v267 = vadd.f32 %v266, %v252
  %v268 = vadd.f32 %v267, %v253
  %v269 = vadd.f32 %v268, %v254
  %v270 = vadd.f32 %v269, %v255
  %v271 = vadd.f32 %v270, %v256
  %v272 = vadd.f32 %v271, %v257
  %v273 = vadd.f32 %v272, %v258
  %v274 = vadd.f32 %v273, %v259
  %v275 = vrot.slane %v274, 4
  %v276 = vadd.f32 %v274, %v275
  %v277 = vrot.slane %v276, 2
  %v278 = vadd.f32 %v276, %v277
  %v279 = vrot.slane %v278, 1
  %v280 = vadd.f32 %v278, %v279
  %v281 = vmul.f32 %v280, 0.0078125
  %v282 = vld [vmem:[%s2] sm:$0x1]
  %v283 = vadd.f32 %v281, 1e-05
  %v284 = vrsqrt.pop %v283
  %v285 = vmul.f32 %v282, %v284
  %v287 = vlaneseq
  %v288 = vshrl.u32 %v287, 7
  %v289 = vsub.s32 0, %v288
  %v290 = vrot.slane %v285, %v289
  %v292 = vmul.f32 %v228, %v290
  %v293 = vmul.f32 %v229, %v290
  %v294 = vmul.f32 %v230, %v290
  %v295 = vmul.f32 %v231, %v290
  %v296 = vmul.f32 %v232, %v290
  %v297 = vmul.f32 %v233, %v290
  %v298 = vmul.f32 %v234, %v290
  %v299 = vmul.f32 %v235, %v290
  %v300 = vmul.f32 %v236, %v290
  %v301 = vmul.f32 %v237, %v290
  %v302 = vmul.f32 %v238, %v290
  %v303 = vmul.f32 %v239, %v290
  %v304 = vmul.f32 %v240, %v290
  %v305 = vmul.f32 %v241, %v290
  %v306 = vmul.f32 %v242, %v290
  %v307 = vmul.f32 %v243, %v290
  %v308 = vld [vmem:[%s3] sm:$0x1]
  %v310 = vlaneseq
  %v311 = vshrl.u32 %v310, 7
  %v312 = vsub.s32 0, %v311
  %v313 = vrot.slane %v308, %v312
  %v315 = vadd.f32 %v292, %v313
  %v316 = vadd.f32 %v293, %v313
  %v317 = vadd.f32 %v294, %v313
  %v318 = vadd.f32 %v295, %v313
  %v319 = vadd.f32 %v296, %v313
  %v320 = vadd.f32 %v297, %v313
  %v321 = vadd.f32 %v298, %v313
  %v322 = vadd.f32 %v299, %v313
  %v323 = vadd.f32 %v300, %v313
  %v324 = vadd.f32 %v301, %v313
  %v325 = vadd.f32 %v302, %v313
  %v326 = vadd.f32 %v303, %v313
  %v327 = vadd.f32 %v304, %v313
  %v328 = vadd.f32 %v305, %v313
  %v329 = vadd.f32 %v306, %v313
  %v330 = vadd.f32 %v307, %v313
  %vm331 = vcmp.ge.f32.partialorder %v315, 0.0
  %vm332 = vcmp.ge.f32.partialorder %v316, 0.0
  %vm333 = vcmp.ge.f32.partialorder %v317, 0.0
  %vm334 = vcmp.ge.f32.partialorder %v318, 0.0
  %vm335 = vcmp.ge.f32.partialorder %v319, 0.0
  %vm336 = vcmp.ge.f32.partialorder %v320, 0.0
  %vm337 = vcmp.ge.f32.partialorder %v321, 0.0
  %vm338 = vcmp.ge.f32.partialorder %v322, 0.0
  %vm339 = vcmp.ge.f32.partialorder %v323, 0.0
  %vm340 = vcmp.ge.f32.partialorder %v324, 0.0
  %vm341 = vcmp.ge.f32.partialorder %v325, 0.0
  %vm342 = vcmp.ge.f32.partialorder %v326, 0.0
  %vm343 = vcmp.ge.f32.partialorder %v327, 0.0
  %vm344 = vcmp.ge.f32.partialorder %v328, 0.0
  %vm345 = vcmp.ge.f32.partialorder %v329, 0.0
  %vm346 = vcmp.ge.f32.partialorder %v330, 0.0
  %v347 = vmul.f32 %v315, 0.2
  %v348 = vmul.f32 %v316, 0.2
  %v349 = vmul.f32 %v317, 0.2
  %v350 = vmul.f32 %v318, 0.2
  %v351 = vmul.f32 %v319, 0.2
  %v352 = vmul.f32 %v320, 0.2
  %v353 = vmul.f32 %v321, 0.2
  %v354 = vmul.f32 %v322, 0.2
  %v355 = vmul.f32 %v323, 0.2
  %v356 = vmul.f32 %v324, 0.2
  %v357 = vmul.f32 %v325, 0.2
  %v358 = vmul.f32 %v326, 0.2
  %v359 = vmul.f32 %v327, 0.2
  %v360 = vmul.f32 %v328, 0.2
  %v361 = vmul.f32 %v329, 0.2
  %v362 = vmul.f32 %v330, 0.2
  %v363 = vsel %vm331, %v315, %v347
  %v364 = vsel %vm332, %v316, %v348
  %v365 = vsel %vm333, %v317, %v349
  %v366 = vsel %vm334, %v318, %v350
  %v367 = vsel %vm335, %v319, %v351
  %v368 = vsel %vm336, %v320, %v352
  %v369 = vsel %vm337, %v321, %v353
  %v370 = vsel %vm338, %v322, %v354
  %v371 = vsel %vm339, %v323, %v355
  %v372 = vsel %vm340, %v324, %v356
  %v373 = vsel %vm341, %v325, %v357
  %v374 = vsel %vm342, %v326, %v358
  %v375 = vsel %vm343, %v327, %v359
  %v376 = vsel %vm344, %v328, %v360
  %v377 = vsel %vm345, %v329, %v361
  %v378 = vsel %vm346, %v330, %v362
  %379 = vst [vmem:[#allocation2] sm:$0xff] 0.0
  %380 = vst [vmem:[#allocation2 + $0x8] sm:$0xff] 0.0
  %381 = vst [vmem:[#allocation2 + $0x10] sm:$0xff] 0.0
  %382 = vst [vmem:[#allocation2 + $0x18] sm:$0xff] 0.0
  %383 = vst [vmem:[#allocation2 + $0x20] sm:$0xff] 0.0
  %384 = vst [vmem:[#allocation2 + $0x40] sm:$0xff] 0.0
  %385 = vst [vmem:[#allocation2 + $0x48] sm:$0xff] 0.0
  %386 = vst [vmem:[#allocation2 + $0x50] sm:$0xff] 0.0
  %387 = vst [vmem:[#allocation2 + $0x58] sm:$0xff] 0.0
  %388 = vst [vmem:[#allocation2 + $0x60] sm:$0xff] 0.0
  %s389 = scalar_lea.vmem [#allocation2], 8
  %v390 = vld [vmem:[%s389 + $0x1] sm:$0xf]
  %v391 = vld [vmem:[%s389 + $0x9] sm:$0xf]
  %v392 = vld [vmem:[%s389 + $0x11] sm:$0xf]
  %v393 = vld [vmem:[%s389 + $0x19] sm:$0xf]
  %v394 = vld [vmem:[%s389 + $0x41] sm:$0xf]
  %v395 = vld [vmem:[%s389 + $0x49] sm:$0xf]
  %v396 = vld [vmem:[%s389 + $0x51] sm:$0xf]
  %v397 = vld [vmem:[%s389 + $0x59] sm:$0xf]
  %v402 = vcombine.high %v363, %v363
  %v403 = vcombine.high %v364, %v364
  %v404 = vcombine.high %v365, %v365
  %v405 = vcombine.high %v366, %v366
  %v410 = vadd.f32 %v390, %v363
  %v411 = vadd.f32 %v391, %v402
  %v412 = vadd.f32 %v392, %v364
  %v413 = vadd.f32 %v393, %v403
  %v414 = vadd.f32 %v394, %v365
  %v415 = vadd.f32 %v395, %v404
  %v416 = vadd.f32 %v396, %v366
  %v417 = vadd.f32 %v397, %v405
  %418 = vst [vmem:[%s389 + $0x1] sm:$0xf] %v410
  %419 = vst [vmem:[%s389 + $0x9] sm:$0xf] %v411
  %420 = vst [vmem:[%s389 + $0x11] sm:$0xf] %v412
  %421 = vst [vmem:[%s389 + $0x19] sm:$0xf] %v413
  %422 = vst [vmem:[%s389 + $0x41] sm:$0xf] %v414
  %423 = vst [vmem:[%s389 + $0x49] sm:$0xf] %v415
  %424 = vst [vmem:[%s389 + $0x51] sm:$0xf] %v416
  %425 = vst [vmem:[%s389 + $0x59] sm:$0xf] %v417
  %426 = vrot.lane.b32.xlu0 %v367, 16
  %v427 = vpop.permute.xlu0 %426
  %428 = vrot.lane.b32.xlu0 %v368, 16
  %v429 = vpop.permute.xlu0 %428
  %430 = vrot.lane.b32.xlu0 %v369, 16
  %v431 = vpop.permute.xlu0 %430
  %432 = vrot.lane.b32.xlu0 %v370, 16
  %v433 = vpop.permute.xlu0 %432
  %v434 = vld [vmem:[%s389] sm:$0xf]
  %v435 = vld [vmem:[%s389 + $0x8] sm:$0xf]
  %v436 = vld [vmem:[%s389 + $0x10] sm:$0xf]
  %v437 = vld [vmem:[%s389 + $0x18] sm:$0xf]
  %v438 = vld [vmem:[%s389 + $0x40] sm:$0xf]
  %v439 = vld [vmem:[%s389 + $0x48] sm:$0xf]
  %v440 = vld [vmem:[%s389 + $0x50] sm:$0xf]
  %v441 = vld [vmem:[%s389 + $0x58] sm:$0xf]
  %v446 = vcombine.high %v427, %v427
  %v447 = vcombine.high %v429, %v429
  %v448 = vcombine.high %v431, %v431
  %v449 = vcombine.high %v433, %v433
  %v454 = vadd.f32 %v434, %v427
  %v455 = vadd.f32 %v435, %v446
  %v456 = vadd.f32 %v436, %v429
  %v457 = vadd.f32 %v437, %v447
  %v458 = vadd.f32 %v438, %v431
  %v459 = vadd.f32 %v439, %v448
  %v460 = vadd.f32 %v440, %v433
  %v461 = vadd.f32 %v441, %v449
  %462 = vst [vmem:[%s389] sm:$0xf] %v454
  %463 = vst [vmem:[%s389 + $0x8] sm:$0xf] %v455
  %464 = vst [vmem:[%s389 + $0x10] sm:$0xf] %v456
  %465 = vst [vmem:[%s389 + $0x18] sm:$0xf] %v457
  %466 = vst [vmem:[%s389 + $0x40] sm:$0xf] %v458
  %467 = vst [vmem:[%s389 + $0x48] sm:$0xf] %v459
  %468 = vst [vmem:[%s389 + $0x50] sm:$0xf] %v460
  %469 = vst [vmem:[%s389 + $0x58] sm:$0xf] %v461
  %470 = vrot.lane.b32.xlu0 %v371, 32
  %v471 = vpop.permute.xlu0 %470
  %472 = vrot.lane.b32.xlu0 %v372, 32
  %v473 = vpop.permute.xlu0 %472
  %474 = vrot.lane.b32.xlu0 %v373, 32
  %v475 = vpop.permute.xlu0 %474
  %476 = vrot.lane.b32.xlu0 %v374, 32
  %v477 = vpop.permute.xlu0 %476
  %v478 = vld [vmem:[#allocation2 + $0x1] sm:$0xf]
  %v479 = vld [vmem:[#allocation2 + $0x9] sm:$0xf]
  %v480 = vld [vmem:[#allocation2 + $0x11] sm:$0xf]
  %v481 = vld [vmem:[#allocation2 + $0x19] sm:$0xf]
  %v482 = vld [vmem:[#allocation2 + $0x41] sm:$0xf]
  %v483 = vld [vmem:[#allocation2 + $0x49] sm:$0xf]
  %v484 = vld [vmem:[#allocation2 + $0x51] sm:$0xf]
  %v485 = vld [vmem:[#allocation2 + $0x59] sm:$0xf]
  %v490 = vcombine.high %v471, %v471
  %v491 = vcombine.high %v473, %v473
  %v492 = vcombine.high %v475, %v475
  %v493 = vcombine.high %v477, %v477
  %v498 = vadd.f32 %v478, %v471
  %v499 = vadd.f32 %v479, %v490
  %v500 = vadd.f32 %v480, %v473
  %v501 = vadd.f32 %v481, %v491
  %v502 = vadd.f32 %v482, %v475
  %v503 = vadd.f32 %v483, %v492
  %v504 = vadd.f32 %v484, %v477
  %v505 = vadd.f32 %v485, %v493
  %506 = vst [vmem:[#allocation2 + $0x1] sm:$0xf] %v498
  %507 = vst [vmem:[#allocation2 + $0x9] sm:$0xf] %v499
  %508 = vst [vmem:[#allocation2 + $0x11] sm:$0xf] %v500
  %509 = vst [vmem:[#allocation2 + $0x19] sm:$0xf] %v501
  %510 = vst [vmem:[#allocation2 + $0x41] sm:$0xf] %v502
  %511 = vst [vmem:[#allocation2 + $0x49] sm:$0xf] %v503
  %512 = vst [vmem:[#allocation2 + $0x51] sm:$0xf] %v504
  %513 = vst [vmem:[#allocation2 + $0x59] sm:$0xf] %v505
  %514 = vrot.lane.b32.xlu0 %v375, 48
  %v515 = vpop.permute.xlu0 %514
  %516 = vrot.lane.b32.xlu0 %v376, 48
  %v517 = vpop.permute.xlu0 %516
  %518 = vrot.lane.b32.xlu0 %v377, 48
  %v519 = vpop.permute.xlu0 %518
  %520 = vrot.lane.b32.xlu0 %v378, 48
  %v521 = vpop.permute.xlu0 %520
  %v522 = vld [vmem:[#allocation2] sm:$0xf]
  %v523 = vld [vmem:[#allocation2 + $0x8] sm:$0xf]
  %v524 = vld [vmem:[#allocation2 + $0x10] sm:$0xf]
  %v525 = vld [vmem:[#allocation2 + $0x18] sm:$0xf]
  %v526 = vld [vmem:[#allocation2 + $0x40] sm:$0xf]
  %v527 = vld [vmem:[#allocation2 + $0x48] sm:$0xf]
  %v528 = vld [vmem:[#allocation2 + $0x50] sm:$0xf]
  %v529 = vld [vmem:[#allocation2 + $0x58] sm:$0xf]
  %v534 = vcombine.high %v515, %v515
  %v535 = vcombine.high %v517, %v517
  %v536 = vcombine.high %v519, %v519
  %v537 = vcombine.high %v521, %v521
  %v542 = vadd.f32 %v522, %v515
  %v543 = vadd.f32 %v523, %v534
  %v544 = vadd.f32 %v524, %v517
  %v545 = vadd.f32 %v525, %v535
  %v546 = vadd.f32 %v526, %v519
  %v547 = vadd.f32 %v527, %v536
  %v548 = vadd.f32 %v528, %v521
  %v549 = vadd.f32 %v529, %v537
  %550 = vst [vmem:[#allocation2] sm:$0xf] %v542
  %551 = vst [vmem:[#allocation2 + $0x8] sm:$0xf] %v543
  %552 = vst [vmem:[#allocation2 + $0x10] sm:$0xf] %v544
  %553 = vst [vmem:[#allocation2 + $0x18] sm:$0xf] %v545
  %554 = vst [vmem:[#allocation2 + $0x40] sm:$0xf] %v546
  %555 = vst [vmem:[#allocation2 + $0x48] sm:$0xf] %v547
  %556 = vst [vmem:[#allocation2 + $0x50] sm:$0xf] %v548
  %557 = vst [vmem:[#allocation2 + $0x58] sm:$0xf] %v549
  %v558 = vld [vmem:[#allocation2] sm:$0xf]
  %v559 = vld [vmem:[#allocation2 + $0x8] sm:$0xf]
  %v560 = vld [vmem:[#allocation2 + $0x10] sm:$0xf]
  %v561 = vld [vmem:[#allocation2 + $0x18] sm:$0xf]
  %v562 = vld [vmem:[#allocation2 + $0x40] sm:$0xf]
  %v563 = vld [vmem:[#allocation2 + $0x48] sm:$0xf]
  %v564 = vld [vmem:[#allocation2 + $0x50] sm:$0xf]
  %v565 = vld [vmem:[#allocation2 + $0x58] sm:$0xf]
  %v566 = vld [vmem:[%s4] sm:$0xff]
  %v567 = vld [vmem:[%s4 + $0x8] sm:$0xff]
  %v568 = vld [vmem:[%s4 + $0x10] sm:$0xff]
  %v569 = vld [vmem:[%s4 + $0x18] sm:$0xff]
  %v570 = vld [vmem:[%s4 + $0x20] sm:$0xff]
  %v571 = vld [vmem:[%s4 + $0x28] sm:$0xff]
  %v572 = vld [vmem:[%s4 + $0x30] sm:$0xff]
  %v573 = vld [vmem:[%s4 + $0x38] sm:$0xff]
  %v574 = vld [vmem:[%s4 + $0x40] sm:$0xff]
  %v575 = vld [vmem:[%s4 + $0x48] sm:$0xff]
  %v576 = vld [vmem:[%s4 + $0x50] sm:$0xff]
  %v577 = vld [vmem:[%s4 + $0x58] sm:$0xff]
  %v578 = vld [vmem:[%s4 + $0x60] sm:$0xff]
  %v579 = vld [vmem:[%s4 + $0x68] sm:$0xff]
  %v580 = vld [vmem:[%s4 + $0x70] sm:$0xff]
  %v581 = vld [vmem:[%s4 + $0x78] sm:$0xff]
  %v582 = vld [vmem:[#allocation2 + $0x1] sm:$0xf]
  %v583 = vld [vmem:[#allocation2 + $0x9] sm:$0xf]
  %v584 = vld [vmem:[#allocation2 + $0x11] sm:$0xf]
  %v585 = vld [vmem:[#allocation2 + $0x19] sm:$0xf]
  %v586 = vld [vmem:[#allocation2 + $0x41] sm:$0xf]
  %v587 = vld [vmem:[#allocation2 + $0x49] sm:$0xf]
  %v588 = vld [vmem:[#allocation2 + $0x51] sm:$0xf]
  %v589 = vld [vmem:[#allocation2 + $0x59] sm:$0xf]
  %v590 = vld [vmem:[%s4 + $0x80] sm:$0xff]
  %v591 = vld [vmem:[%s4 + $0x88] sm:$0xff]
  %v592 = vld [vmem:[%s4 + $0x90] sm:$0xff]
  %v593 = vld [vmem:[%s4 + $0x98] sm:$0xff]
  %v594 = vld [vmem:[%s4 + $0xa0] sm:$0xff]
  %v595 = vld [vmem:[%s4 + $0xa8] sm:$0xff]
  %v596 = vld [vmem:[%s4 + $0xb0] sm:$0xff]
  %v597 = vld [vmem:[%s4 + $0xb8] sm:$0xff]
  %v598 = vld [vmem:[%s4 + $0xc0] sm:$0xff]
  %v599 = vld [vmem:[%s4 + $0xc8] sm:$0xff]
  %v600 = vld [vmem:[%s4 + $0xd0] sm:$0xff]
  %v601 = vld [vmem:[%s4 + $0xd8] sm:$0xff]
  %v602 = vld [vmem:[%s4 + $0xe0] sm:$0xff]
  %v603 = vld [vmem:[%s4 + $0xe8] sm:$0xff]
  %v604 = vld [vmem:[%s4 + $0xf0] sm:$0xff]
  %v605 = vld [vmem:[%s4 + $0xf8] sm:$0xff]
  %v614 = vcombine.low %v582, %v583
  %v615 = vcombine.low %v584, %v585
  %v616 = vcombine.low %v586, %v587
  %v617 = vcombine.low %v588, %v589
  %622 = vmatprep.subr.mxu0 0.0
  %623 = vmatpush1.msra.mxu0 %v590
  %624 = vmatprep.subr.mxu0 0.0
  %625 = vmatpush1.msra.mxu0 %v591
  %626 = vmatprep.subr.mxu0 0.0
  %627 = vmatpush1.msra.mxu0 %v592
  %628 = vmatprep.subr.mxu0 0.0
  %629 = vmatpush1.msra.mxu0 %v593
  %630 = vmatprep.subr.mxu0 0.0
  %631 = vmatpush1.msra.mxu0 %v594
  %632 = vmatprep.subr.mxu0 0.0
  %633 = vmatpush1.msra.mxu0 %v595
  %634 = vmatprep.subr.mxu0 0.0
  %635 = vmatpush1.msra.mxu0 %v596
  %636 = vmatprep.subr.mxu0 0.0
  %637 = vmatpush1.msra.mxu0 %v597
  %638 = vmatprep.subr.mxu0 0.0
  %639 = vmatpush1.msra.mxu0 %v598
  %640 = vmatprep.subr.mxu0 0.0
  %641 = vmatpush1.msra.mxu0 %v599
  %642 = vmatprep.subr.mxu0 0.0
  %643 = vmatpush1.msra.mxu0 %v600
  %644 = vmatprep.subr.mxu0 0.0
  %645 = vmatpush1.msra.mxu0 %v601
  %646 = vmatprep.subr.mxu0 0.0
  %647 = vmatpush1.msra.mxu0 %v602
  %648 = vmatprep.subr.mxu0 0.0
  %649 = vmatpush1.msra.mxu0 %v603
  %650 = vmatprep.subr.mxu0 0.0
  %651 = vmatpush1.msra.mxu0 %v604
  %652 = vmatprep.subr.mxu0 0.0
  %653 = vmatpush1.msra.mxu0 %v605
  %654 = vmatprep.subr.mxu0 0.0
  %655 = vmatpush1.msra.mxu0 0.0
  %656 = vmatprep.subr.mxu0 0.0
  %657 = vmatpush1.msra.mxu0 0.0
  %658 = vmatprep.subr.mxu0 0.0
  %659 = vmatpush1.msra.mxu0 0.0
  %660 = vmatprep.subr.mxu0 0.0
  %661 = vmatpush1.msra.mxu0 0.0
  %662 = vmatprep.subr.mxu0 0.0
  %663 = vmatpush1.msra.mxu0 0.0
  %664 = vmatprep.subr.mxu0 0.0
  %665 = vmatpush1.msra.mxu0 0.0
  %666 = vmatprep.subr.mxu0 0.0
  %667 = vmatpush1.msra.mxu0 0.0
  %668 = vmatprep.subr.mxu0 0.0
  %669 = vmatpush1.msra.mxu0 0.0
  %670 = vmatprep.subr.mxu0 0.0
  %671 = vmatpush1.msra.mxu0 0.0
  %672 = vmatprep.subr.mxu0 0.0
  %673 = vmatpush1.msra.mxu0 0.0
  %674 = vmatprep.subr.mxu0 0.0
  %675 = vmatpush1.msra.mxu0 0.0
  %676 = vmatprep.subr.mxu0 0.0
  %677 = vmatpush1.msra.mxu0 0.0
  %678 = vmatprep.subr.mxu0 0.0
  %679 = vmatpush1.msra.mxu0 0.0
  %680 = vmatprep.subr.mxu0 0.0
  %681 = vmatpush1.msra.mxu0 0.0
  %682 = vmatprep.subr.mxu0 0.0
  %683 = vmatpush1.msra.mxu0 0.0
  %684 = vmatprep.subr.mxu0 0.0
  %685 = vmatpush1.msra.mxu0 0.0
  %686 = vmatprep.mubr.f32.mxu0 0.0
  %687 = vmatmul.mubr.f32.gmra.mrb[0].mxu0 %v614
  %v688 = vpop.f32.mrb[0].mxu0
  %v689 = vadd.f32 0.0, %v688
  %v690 = vpop.f32.mrb[0].mxu0
  %691 = vmatprep.mubr.f32.mxu0 0.0
  %692 = vmatmul.mubr.f32.gmra.mrb[0].mxu0 %v615
  %v693 = vpop.f32.mrb[0].mxu0
  %v694 = vadd.f32 0.0, %v693
  %v695 = vpop.f32.mrb[0].mxu0
  %696 = vmatprep.mubr.f32.mxu0 0.0
  %697 = vmatmul.mubr.f32.gmra.mrb[0].mxu0 %v616
  %v698 = vpop.f32.mrb[0].mxu0
  %v699 = vadd.f32 0.0, %v698
  %v700 = vpop.f32.mrb[0].mxu0
  %701 = vmatprep.mubr.f32.mxu0 0.0
  %702 = vmatmul.mubr.f32.gmra.mrb[0].mxu0 %v617
  %v703 = vpop.f32.mrb[0].mxu0
  %v704 = vadd.f32 0.0, %v703
  %v705 = vpop.f32.mrb[0].mxu0
  %706 = vdwg.mxu0
  %v715 = vcombine.low %v558, %v559
  %v716 = vcombine.low %v560, %v561
  %v717 = vcombine.low %v562, %v563
  %v718 = vcombine.low %v564, %v565
  %723 = vmatprep.subr.mxu0 0.0
  %724 = vmatpush1.msra.mxu0 %v566
  %725 = vmatprep.subr.mxu0 0.0
  %726 = vmatpush1.msra.mxu0 %v567
  %727 = vmatprep.subr.mxu0 0.0
  %728 = vmatpush1.msra.mxu0 %v568
  %729 = vmatprep.subr.mxu0 0.0
  %730 = vmatpush1.msra.mxu0 %v569
  %731 = vmatprep.subr.mxu0 0.0
  %732 = vmatpush1.msra.mxu0 %v570
  %733 = vmatprep.subr.mxu0 0.0
  %734 = vmatpush1.msra.mxu0 %v571
  %735 = vmatprep.subr.mxu0 0.0
  %736 = vmatpush1.msra.mxu0 %v572
  %737 = vmatprep.subr.mxu0 0.0
  %738 = vmatpush1.msra.mxu0 %v573
  %739 = vmatprep.subr.mxu0 0.0
  %740 = vmatpush1.msra.mxu0 %v574
  %741 = vmatprep.subr.mxu0 0.0
  %742 = vmatpush1.msra.mxu0 %v575
  %743 = vmatprep.subr.mxu0 0.0
  %744 = vmatpush1.msra.mxu0 %v576
  %745 = vmatprep.subr.mxu0 0.0
  %746 = vmatpush1.msra.mxu0 %v577
  %747 = vmatprep.subr.mxu0 0.0
  %748 = vmatpush1.msra.mxu0 %v578
  %749 = vmatprep.subr.mxu0 0.0
  %750 = vmatpush1.msra.mxu0 %v579
  %751 = vmatprep.subr.mxu0 0.0
  %752 = vmatpush1.msra.mxu0 %v580
  %753 = vmatprep.subr.mxu0 0.0
  %754 = vmatpush1.msra.mxu0 %v581
  %755 = vmatprep.subr.mxu0 0.0
  %756 = vmatpush1.msra.mxu0 0.0
  %757 = vmatprep.subr.mxu0 0.0
  %758 = vmatpush1.msra.mxu0 0.0
  %759 = vmatprep.subr.mxu0 0.0
  %760 = vmatpush1.msra.mxu0 0.0
  %761 = vmatprep.subr.mxu0 0.0
  %762 = vmatpush1.msra.mxu0 0.0
  %763 = vmatprep.subr.mxu0 0.0
  %764 = vmatpush1.msra.mxu0 0.0
  %765 = vmatprep.subr.mxu0 0.0
  %766 = vmatpush1.msra.mxu0 0.0
  %767 = vmatprep.subr.mxu0 0.0
  %768 = vmatpush1.msra.mxu0 0.0
  %769 = vmatprep.subr.mxu0 0.0
  %770 = vmatpush1.msra.mxu0 0.0
  %771 = vmatprep.subr.mxu0 0.0
  %772 = vmatpush1.msra.mxu0 0.0
  %773 = vmatprep.subr.mxu0 0.0
  %774 = vmatpush1.msra.mxu0 0.0
  %775 = vmatprep.subr.mxu0 0.0
  %776 = vmatpush1.msra.mxu0 0.0
  %777 = vmatprep.subr.mxu0 0.0
  %778 = vmatpush1.msra.mxu0 0.0
  %779 = vmatprep.subr.mxu0 0.0
  %780 = vmatpush1.msra.mxu0 0.0
  %781 = vmatprep.subr.mxu0 0.0
  %782 = vmatpush1.msra.mxu0 0.0
  %783 = vmatprep.subr.mxu0 0.0
  %784 = vmatpush1.msra.mxu0 0.0
  %785 = vmatprep.subr.mxu0 0.0
  %786 = vmatpush1.msra.mxu0 0.0
  %787 = vmatprep.mubr.f32.mxu0 0.0
  %788 = vmatmul.mubr.f32.gmra.mrb[0].mxu0 %v715
  %v789 = vpop.f32.mrb[0].mxu0
  %v790 = vadd.f32 %v689, %v789
  %v791 = vpop.f32.mrb[0].mxu0
  %792 = vmatprep.mubr.f32.mxu0 0.0
  %793 = vmatmul.mubr.f32.gmra.mrb[0].mxu0 %v716
  %v794 = vpop.f32.mrb[0].mxu0
  %v795 = vadd.f32 %v694, %v794
  %v796 = vpop.f32.mrb[0].mxu0
  %797 = vmatprep.mubr.f32.mxu0 0.0
  %798 = vmatmul.mubr.f32.gmra.mrb[0].mxu0 %v717
  %v799 = vpop.f32.mrb[0].mxu0
  %v800 = vadd.f32 %v699, %v799
  %v801 = vpop.f32.mrb[0].mxu0
  %802 = vmatprep.mubr.f32.mxu0 0.0
  %803 = vmatmul.mubr.f32.gmra.mrb[0].mxu0 %v718
  %v804 = vpop.f32.mrb[0].mxu0
  %v805 = vadd.f32 %v704, %v804
  %v806 = vpop.f32.mrb[0].mxu0
  %807 = vdwg.mxu0
  %v808 = vld [vmem:[%s389] sm:$0xf]
  %v809 = vld [vmem:[%s389 + $0x8] sm:$0xf]
  %v810 = vld [vmem:[%s389 + $0x10] sm:$0xf]
  %v811 = vld [vmem:[%s389 + $0x18] sm:$0xf]
  %v812 = vld [vmem:[%s389 + $0x40] sm:$0xf]
  %v813 = vld [vmem:[%s389 + $0x48] sm:$0xf]
  %v814 = vld [vmem:[%s389 + $0x50] sm:$0xf]
  %v815 = vld [vmem:[%s389 + $0x58] sm:$0xf]
  %v816 = vld [vmem:[%s4 + $0x100] sm:$0xff]
  %v817 = vld [vmem:[%s4 + $0x108] sm:$0xff]
  %v818 = vld [vmem:[%s4 + $0x110] sm:$0xff]
  %v819 = vld [vmem:[%s4 + $0x118] sm:$0xff]
  %v820 = vld [vmem:[%s4 + $0x120] sm:$0xff]
  %v821 = vld [vmem:[%s4 + $0x128] sm:$0xff]
  %v822 = vld [vmem:[%s4 + $0x130] sm:$0xff]
  %v823 = vld [vmem:[%s4 + $0x138] sm:$0xff]
  %v824 = vld [vmem:[%s4 + $0x140] sm:$0xff]
  %v825 = vld [vmem:[%s4 + $0x148] sm:$0xff]
  %v826 = vld [vmem:[%s4 + $0x150] sm:$0xff]
  %v827 = vld [vmem:[%s4 + $0x158] sm:$0xff]
  %v828 = vld [vmem:[%s4 + $0x160] sm:$0xff]
  %v829 = vld [vmem:[%s4 + $0x168] sm:$0xff]
  %v830 = vld [vmem:[%s4 + $0x170] sm:$0xff]
  %v831 = vld [vmem:[%s4 + $0x178] sm:$0xff]
  %v840 = vcombine.low %v808, %v809
  %v841 = vcombine.low %v810, %v811
  %v842 = vcombine.low %v812, %v813
  %v843 = vcombine.low %v814, %v815
  %848 = vmatprep.subr.mxu0 0.0
  %849 = vmatpush1.msra.mxu0 %v816
  %850 = vmatprep.subr.mxu0 0.0
  %851 = vmatpush1.msra.mxu0 %v817
  %852 = vmatprep.subr.mxu0 0.0
  %853 = vmatpush1.msra.mxu0 %v818
  %854 = vmatprep.subr.mxu0 0.0
  %855 = vmatpush1.msra.mxu0 %v819
  %856 = vmatprep.subr.mxu0 0.0
  %857 = vmatpush1.msra.mxu0 %v820
  %858 = vmatprep.subr.mxu0 0.0
  %859 = vmatpush1.msra.mxu0 %v821
  %860 = vmatprep.subr.mxu0 0.0
  %861 = vmatpush1.msra.mxu0 %v822
  %862 = vmatprep.subr.mxu0 0.0
  %863 = vmatpush1.msra.mxu0 %v823
  %864 = vmatprep.subr.mxu0 0.0
  %865 = vmatpush1.msra.mxu0 %v824
  %866 = vmatprep.subr.mxu0 0.0
  %867 = vmatpush1.msra.mxu0 %v825
  %868 = vmatprep.subr.mxu0 0.0
  %869 = vmatpush1.msra.mxu0 %v826
  %870 = vmatprep.subr.mxu0 0.0
  %871 = vmatpush1.msra.mxu0 %v827
  %872 = vmatprep.subr.mxu0 0.0
  %873 = vmatpush1.msra.mxu0 %v828
  %874 = vmatprep.subr.mxu0 0.0
  %875 = vmatpush1.msra.mxu0 %v829
  %876 = vmatprep.subr.mxu0 0.0
  %877 = vmatpush1.msra.mxu0 %v830
  %878 = vmatprep.subr.mxu0 0.0
  %879 = vmatpush1.msra.mxu0 %v831
  %880 = vmatprep.subr.mxu0 0.0
  %881 = vmatpush1.msra.mxu0 0.0
  %882 = vmatprep.subr.mxu0 0.0
  %883 = vmatpush1.msra.mxu0 0.0
  %884 = vmatprep.subr.mxu0 0.0
  %885 = vmatpush1.msra.mxu0 0.0
  %886 = vmatprep.subr.mxu0 0.0
  %887 = vmatpush1.msra.mxu0 0.0
  %888 = vmatprep.subr.mxu0 0.0
  %889 = vmatpush1.msra.mxu0 0.0
  %890 = vmatprep.subr.mxu0 0.0
  %891 = vmatpush1.msra.mxu0 0.0
  %892 = vmatprep.subr.mxu0 0.0
  %893 = vmatpush1.msra.mxu0 0.0
  %894 = vmatprep.subr.mxu0 0.0
  %895 = vmatpush1.msra.mxu0 0.0
  %896 = vmatprep.subr.mxu0 0.0
  %897 = vmatpush1.msra.mxu0 0.0
  %898 = vmatprep.subr.mxu0 0.0
  %899 = vmatpush1.msra.mxu0 0.0
  %900 = vmatprep.subr.mxu0 0.0
  %901 = vmatpush1.msra.mxu0 0.0
  %902 = vmatprep.subr.mxu0 0.0
  %903 = vmatpush1.msra.mxu0 0.0
  %904 = vmatprep.subr.mxu0 0.0
  %905 = vmatpush1.msra.mxu0 0.0
  %906 = vmatprep.subr.mxu0 0.0
  %907 = vmatpush1.msra.mxu0 0.0
  %908 = vmatprep.subr.mxu0 0.0
  %909 = vmatpush1.msra.mxu0 0.0
  %910 = vmatprep.subr.mxu0 0.0
  %911 = vmatpush1.msra.mxu0 0.0
  %912 = vmatprep.mubr.f32.mxu0 0.0
  %913 = vmatmul.mubr.f32.gmra.mrb[0].mxu0 %v840
  %v914 = vpop.f32.mrb[0].mxu0
  %v915 = vadd.f32 0.0, %v914
  %v916 = vpop.f32.mrb[0].mxu0
  %917 = vmatprep.mubr.f32.mxu0 0.0
  %918 = vmatmul.mubr.f32.gmra.mrb[0].mxu0 %v841
  %v919 = vpop.f32.mrb[0].mxu0
  %v920 = vadd.f32 0.0, %v919
  %v921 = vpop.f32.mrb[0].mxu0
  %922 = vmatprep.mubr.f32.mxu0 0.0
  %923 = vmatmul.mubr.f32.gmra.mrb[0].mxu0 %v842
  %v924 = vpop.f32.mrb[0].mxu0
  %v925 = vadd.f32 0.0, %v924
  %v926 = vpop.f32.mrb[0].mxu0
  %927 = vmatprep.mubr.f32.mxu0 0.0
  %928 = vmatmul.mubr.f32.gmra.mrb[0].mxu0 %v843
  %v929 = vpop.f32.mrb[0].mxu0
  %v930 = vadd.f32 0.0, %v929
  %v931 = vpop.f32.mrb[0].mxu0
  %932 = vdwg.mxu0
  %v933 = vadd.f32 %v790, %v915
  %v934 = vadd.f32 %v795, %v920
  %v935 = vadd.f32 %v800, %v925
  %v936 = vadd.f32 %v805, %v930
  %v937 = vld [vmem:[%s389 + $0x1] sm:$0xf]
  %v938 = vld [vmem:[%s389 + $0x9] sm:$0xf]
  %v939 = vld [vmem:[%s389 + $0x11] sm:$0xf]
  %v940 = vld [vmem:[%s389 + $0x19] sm:$0xf]
  %v941 = vld [vmem:[%s389 + $0x41] sm:$0xf]
  %v942 = vld [vmem:[%s389 + $0x49] sm:$0xf]
  %v943 = vld [vmem:[%s389 + $0x51] sm:$0xf]
  %v944 = vld [vmem:[%s389 + $0x59] sm:$0xf]
  %v945 = vld [vmem:[%s4 + $0x180] sm:$0xff]
  %v946 = vld [vmem:[%s4 + $0x188] sm:$0xff]
  %v947 = vld [vmem:[%s4 + $0x190] sm:$0xff]
  %v948 = vld [vmem:[%s4 + $0x198] sm:$0xff]
  %v949 = vld [vmem:[%s4 + $0x1a0] sm:$0xff]
  %v950 = vld [vmem:[%s4 + $0x1a8] sm:$0xff]
  %v951 = vld [vmem:[%s4 + $0x1b0] sm:$0xff]
  %v952 = vld [vmem:[%s4 + $0x1b8] sm:$0xff]
  %v953 = vld [vmem:[%s4 + $0x1c0] sm:$0xff]
  %v954 = vld [vmem:[%s4 + $0x1c8] sm:$0xff]
  %v955 = vld [vmem:[%s4 + $0x1d0] sm:$0xff]
  %v956 = vld [vmem:[%s4 + $0x1d8] sm:$0xff]
  %v957 = vld [vmem:[%s4 + $0x1e0] sm:$0xff]
  %v958 = vld [vmem:[%s4 + $0x1e8] sm:$0xff]
  %v959 = vld [vmem:[%s4 + $0x1f0] sm:$0xff]
  %v960 = vld [vmem:[%s4 + $0x1f8] sm:$0xff]
  %v969 = vcombine.low %v937, %v938
  %v970 = vcombine.low %v939, %v940
  %v971 = vcombine.low %v941, %v942
  %v972 = vcombine.low %v943, %v944
  %977 = vmatprep.subr.mxu0 0.0
  %978 = vmatpush1.msra.mxu0 %v945
  %979 = vmatprep.subr.mxu0 0.0
  %980 = vmatpush1.msra.mxu0 %v946
  %981 = vmatprep.subr.mxu0 0.0
  %982 = vmatpush1.msra.mxu0 %v947
  %983 = vmatprep.subr.mxu0 0.0
  %984 = vmatpush1.msra.mxu0 %v948
  %985 = vmatprep.subr.mxu0 0.0
  %986 = vmatpush1.msra.mxu0 %v949
  %987 = vmatprep.subr.mxu0 0.0
  %988 = vmatpush1.msra.mxu0 %v950
  %989 = vmatprep.subr.mxu0 0.0
  %990 = vmatpush1.msra.mxu0 %v951
  %991 = vmatprep.subr.mxu0 0.0
  %992 = vmatpush1.msra.mxu0 %v952
  %993 = vmatprep.subr.mxu0 0.0
  %994 = vmatpush1.msra.mxu0 %v953
  %995 = vmatprep.subr.mxu0 0.0
  %996 = vmatpush1.msra.mxu0 %v954
  %997 = vmatprep.subr.mxu0 0.0
  %998 = vmatpush1.msra.mxu0 %v955
  %999 = vmatprep.subr.mxu0 0.0
  %1000 = vmatpush1.msra.mxu0 %v956
  %1001 = vmatprep.subr.mxu0 0.0
  %1002 = vmatpush1.msra.mxu0 %v957
  %1003 = vmatprep.subr.mxu0 0.0
  %1004 = vmatpush1.msra.mxu0 %v958
  %1005 = vmatprep.subr.mxu0 0.0
  %1006 = vmatpush1.msra.mxu0 %v959
  %1007 = vmatprep.subr.mxu0 0.0
  %1008 = vmatpush1.msra.mxu0 %v960
  %1009 = vmatprep.subr.mxu0 0.0
  %1010 = vmatpush1.msra.mxu0 0.0
  %1011 = vmatprep.subr.mxu0 0.0
  %1012 = vmatpush1.msra.mxu0 0.0
  %1013 = vmatprep.subr.mxu0 0.0
  %1014 = vmatpush1.msra.mxu0 0.0
  %1015 = vmatprep.subr.mxu0 0.0
  %1016 = vmatpush1.msra.mxu0 0.0
  %1017 = vmatprep.subr.mxu0 0.0
  %1018 = vmatpush1.msra.mxu0 0.0
  %1019 = vmatprep.subr.mxu0 0.0
  %1020 = vmatpush1.msra.mxu0 0.0
  %1021 = vmatprep.subr.mxu0 0.0
  %1022 = vmatpush1.msra.mxu0 0.0
  %1023 = vmatprep.subr.mxu0 0.0
  %1024 = vmatpush1.msra.mxu0 0.0
  %1025 = vmatprep.subr.mxu0 0.0
  %1026 = vmatpush1.msra.mxu0 0.0
  %1027 = vmatprep.subr.mxu0 0.0
  %1028 = vmatpush1.msra.mxu0 0.0
  %1029 = vmatprep.subr.mxu0 0.0
  %1030 = vmatpush1.msra.mxu0 0.0
  %1031 = vmatprep.subr.mxu0 0.0
  %1032 = vmatpush1.msra.mxu0 0.0
  %1033 = vmatprep.subr.mxu0 0.0
  %1034 = vmatpush1.msra.mxu0 0.0
  %1035 = vmatprep.subr.mxu0 0.0
  %1036 = vmatpush1.msra.mxu0 0.0
  %1037 = vmatprep.subr.mxu0 0.0
  %1038 = vmatpush1.msra.mxu0 0.0
  %1039 = vmatprep.subr.mxu0 0.0
  %1040 = vmatpush1.msra.mxu0 0.0
  %1041 = vmatprep.mubr.f32.mxu0 0.0
  %1042 = vmatmul.mubr.f32.gmra.mrb[0].mxu0 %v969
  %v1043 = vpop.f32.mrb[0].mxu0
  %v1044 = vadd.f32 0.0, %v1043
  %v1045 = vpop.f32.mrb[0].mxu0
  %1046 = vmatprep.mubr.f32.mxu0 0.0
  %1047 = vmatmul.mubr.f32.gmra.mrb[0].mxu0 %v970
  %v1048 = vpop.f32.mrb[0].mxu0
  %v1049 = vadd.f32 0.0, %v1048
  %v1050 = vpop.f32.mrb[0].mxu0
  %1051 = vmatprep.mubr.f32.mxu0 0.0
  %1052 = vmatmul.mubr.f32.gmra.mrb[0].mxu0 %v971
  %v1053 = vpop.f32.mrb[0].mxu0
  %v1054 = vadd.f32 0.0, %v1053
  %v1055 = vpop.f32.mrb[0].mxu0
  %1056 = vmatprep.mubr.f32.mxu0 0.0
  %1057 = vmatmul.mubr.f32.gmra.mrb[0].mxu0 %v972
  %v1058 = vpop.f32.mrb[0].mxu0
  %v1059 = vadd.f32 0.0, %v1058
  %v1060 = vpop.f32.mrb[0].mxu0
  %1061 = vdwg.mxu0
  %v1062 = vadd.f32 %v933, %v1044
  %v1063 = vadd.f32 %v934, %v1049
  %v1064 = vadd.f32 %v935, %v1054
  %v1065 = vadd.f32 %v936, %v1059
  %v1066 = vadd.f32 %v1062, %v1063
  %v1067 = vadd.f32 %v1066, %v1064
  %v1068 = vadd.f32 %v1067, %v1065
  %v1069 = vrot.slane %v1068, 4
  %v1070 = vadd.f32 %v1068, %v1069
  %v1071 = vrot.slane %v1070, 2
  %v1072 = vadd.f32 %v1070, %v1071
  %v1073 = vrot.slane %v1072, 1
  %v1074 = vadd.f32 %v1072, %v1073
  %v1075 = vmul.f32 %v1074, 0.03125
  %v1076 = vsub.f32 %v1062, %v1075
  %v1077 = vsub.f32 %v1063, %v1075
  %v1078 = vsub.f32 %v1064, %v1075
  %v1079 = vsub.f32 %v1065, %v1075
  %v1080 = vmul.f32 %v1076, %v1076
  %v1081 = vmul.f32 %v1077, %v1077
  %v1082 = vmul.f32 %v1078, %v1078
  %v1083 = vmul.f32 %v1079, %v1079
  %v1084 = vadd.f32 %v1080, %v1081
  %v1085 = vadd.f32 %v1084, %v1082
  %v1086 = vadd.f32 %v1085, %v1083
  %v1087 = vrot.slane %v1086, 4
  %v1088 = vadd.f32 %v1086, %v1087
  %v1089 = vrot.slane %v1088, 2
  %v1090 = vadd.f32 %v1088, %v1089
  %v1091 = vrot.slane %v1090, 1
  %v1092 = vadd.f32 %v1090, %v1091
  %v1093 = vmul.f32 %v1092, 0.03125
  %v1094 = vld [vmem:[%s5] sm:$0x1]
  %v1095 = vadd.f32 %v1093, 1e-05
  %v1096 = vrsqrt.pop %v1095
  %v1097 = vmul.f32 %v1094, %v1096
  %v1099 = vlaneseq
  %v1100 = vshrl.u32 %v1099, 7
  %v1101 = vsub.s32 0, %v1100
  %v1102 = vrot.slane %v1097, %v1101
  %v1104 = vmul.f32 %v1076, %v1102
  %v1105 = vmul.f32 %v1077, %v1102
  %v1106 = vmul.f32 %v1078, %v1102
  %v1107 = vmul.f32 %v1079, %v1102
  %v1108 = vld [vmem:[%s6] sm:$0x1]
  %v1110 = vlaneseq
  %v1111 = vshrl.u32 %v1110, 7
  %v1112 = vsub.s32 0, %v1111
  %v1113 = vrot.slane %v1108, %v1112
  %v1115 = vadd.f32 %v1104, %v1113
  %v1116 = vadd.f32 %v1105, %v1113
  %v1117 = vadd.f32 %v1106, %v1113
  %v1118 = vadd.f32 %v1107, %v1113
  %vm1119 = vcmp.ge.f32.partialorder %v1115, 0.0
  %vm1120 = vcmp.ge.f32.partialorder %v1116, 0.0
  %vm1121 = vcmp.ge.f32.partialorder %v1117, 0.0
  %vm1122 = vcmp.ge.f32.partialorder %v1118, 0.0
  %v1123 = vmul.f32 %v1115, 0.2
  %v1124 = vmul.f32 %v1116, 0.2
  %v1125 = vmul.f32 %v1117, 0.2
  %v1126 = vmul.f32 %v1118, 0.2
  %v1127 = vsel %vm1119, %v1115, %v1123
  %v1128 = vsel %vm1120, %v1116, %v1124
  %v1129 = vsel %vm1121, %v1117, %v1125
  %v1130 = vsel %vm1122, %v1118, %v1126
  %v1131 = vld [vmem:[%s7] sm:$0xff]
  %v1132 = vld [vmem:[%s7 + $0x8] sm:$0xff]
  %v1133 = vmul.f32 %v1127, %v1131
  %v1134 = vmul.f32 %v1128, %v1132
  %v1135 = vmul.f32 %v1129, %v1131
  %v1136 = vmul.f32 %v1130, %v1132
  %1137 = vadd.xlane.f32.xlu0 %v1133
  %v1138 = vpop.xlane.xlu0 %1137
  %1139 = vadd.xlane.f32.xlu0 %v1134
  %v1140 = vpop.xlane.xlu0 %1139
  %1141 = vadd.xlane.f32.xlu0 %v1135
  %v1142 = vpop.xlane.xlu0 %1141
  %1143 = vadd.xlane.f32.xlu0 %v1136
  %v1144 = vpop.xlane.xlu0 %1143
  %v1149 = vlaneseq
  %v1150 = vand.u32 %v1149, 127
  %v1151 = vlaneseq
  %v1152 = vshrl.u32 %v1151, 7
  %v1153 = vsub.s32 %v1150, %v1152
  %v1154 = vrot.slane %v1138, %v1153
  %v1155 = vadd.s32 %v1150, 4294967288
  %v1156 = vlaneseq
  %v1157 = vshrl.u32 %v1156, 7
  %v1158 = vsub.s32 %v1155, %v1157
  %v1159 = vrot.slane %v1140, %v1158
  %vm1160 = vcmask 130112
  %v1161 = vsel %vm1160, %v1159, %v1154
  %v1162 = vlaneseq
  %v1163 = vshrl.u32 %v1162, 7
  %v1164 = vsub.s32 %v1150, %v1163
  %v1165 = vrot.slane %v1142, %v1164
  %v1166 = vlaneseq
  %v1167 = vshrl.u32 %v1166, 7
  %v1168 = vsub.s32 %v1155, %v1167
  %v1169 = vrot.slane %v1144, %v1168
  %v1170 = vsel %vm1160, %v1169, %v1165
  %vm1171 = vcmask 1041409
  %v1172 = vsel %vm1171, %v1170, %v1161
  %vm1174 = vcmask 123904
  %v1175 = vsel %vm1174, %v1172, 0.0
  %1176 = vadd.xlane.f32.xlu0 %v1175
  %v1177 = vpop.xlane.xlu0 %1176
  %v1178 = vxor.u32 %v1177, 2147483648
  %v1179 = vmul.f32 %v1178, 1.442695
  %v1180 = vpow.pop %v1179
  %v1181 = vadd.f32 %v1180, 1.0
  %v1182 = vrcp.pop %v1181
  %v1183 = vmul.f32 1.0, %v1182
  %vm1184 = vcmask 1024
  %1185 = vst.msk [vmem:[%s8] sm:$0x3] %vm1184, %v1183
  // Predicated region
  $region34: #{discriminator_forward.1} parent=0 // pred_check
    _
  $region35: #{discriminator_forward.1} parent=0 // pred_check_branch
    %1187 = sbr.rel (0) target = $region37
  $region36: #{discriminator_forward.1} parent=0 // pred_region
    _
  $region37: #{discriminator_forward.1} parent=0 // pred_fallthru
    _
  // Predicated region
  $region38: #{discriminator_forward.1} parent=0 // pred_check
    _
  $region39: #{discriminator_forward.1} parent=0 // pred_check_branch
    %1189 = sbr.rel (0) target = $region41
  $region40: #{discriminator_forward.1} parent=0 // pred_region
    _
  $region41: #{discriminator_forward.1} parent=0 // pred_fallthru
    _

</llo_original>
